<compile_context>
chip_gen: v7x
topology: tpu7x:2x2x1
jax: 0.10.0
libtpu: 0.0.40
codegen_flags: <defaults>
</compile_context>

<pallas_src>
import functools

import jax
import jax.numpy as jnp
from jax.experimental import pallas as pl
from jax.experimental.pallas import tpu as pltpu


def _conv3x3_taps(x, w_ref, m_ref, H, W):
    """3x3 same-conv (stride 1, pad 1) on a channel-major flattened slab.

    x:      (Cin, H*W) f32 values (lane-dense).
    w_ref:  (9, Cout, Cin) ref — tap-major folded weights (BN scale included).
    m_ref:  (9, 1, H*W) ref — per-tap validity masks (0/1 f32).
    Returns (Cout, H*W) f32.
    """
    HW = H * W
    cout = w_ref.shape[1]
    acc = jnp.zeros((cout, HW), jnp.float32)
    t = 0
    for dh in (-1, 0, 1):
        for dw in (-1, 0, 1):
            if dh == 0 and dw == 0:
                tap = x                                     # center: no shift/mask
            else:
                shift = (-(dh * W + dw)) % HW               # static lane rotation
                tap = pltpu.roll(x, shift, axis=1) * m_ref[t]
            # (Cout, Cin) @ (Cin, H*W) -> (Cout, H*W), lane-dense MXU accumulate
            acc = acc + jnp.dot(w_ref[t], tap,
                                preferred_element_type=jnp.float32)
            t += 1
    return acc


def basic_block_kernel(x_ref, w1_ref, b1_ref, w2_ref, b2_ref, m_ref, o_ref,
                       *, H, W):
    x = x_ref[0]                                           # (C, H*W) f32
    # conv1 (BN1 scale folded into w1) + BN1 bias + ReLU
    y = _conv3x3_taps(x, w1_ref, m_ref, H, W)
    y = jnp.maximum(y + b1_ref[...], 0.0)
    # conv2 (BN2 scale folded into w2) + BN2 bias + residual + ReLU
    y = _conv3x3_taps(y, w2_ref, m_ref, H, W)
    y = y + b2_ref[...] + x
    o_ref[0] = jnp.maximum(y, 0.0).astype(o_ref.dtype)


def _fold_bn(gamma, beta, mean, var, eps=1e-5):
    scale = gamma / jnp.sqrt(var + eps)
    bias = beta - mean * scale
    return scale, bias


def _fold_weight(w_oihw, scale):
    """(Cout, Cin, 3, 3) PyTorch weight -> (9, Cout, Cin), BN scale folded in."""
    cout, cin = w_oihw.shape[0], w_oihw.shape[1]
    w = jnp.transpose(w_oihw, (2, 3, 0, 1)).reshape(9, cout, cin)  # t = kh*3+kw
    return (w * scale[None, :, None]).astype(jnp.float32)


def _make_tap_masks(H, W):
    """(9, 1, H*W) f32 masks: 1 where tap (dh,dw) reads a valid (non-pad) pixel."""
    p = jnp.arange(H * W, dtype=jnp.int32)
    ii, jj = p // W, p % W
    rows = []
    for dh in (-1, 0, 1):
        for dw in (-1, 0, 1):
            valid = ((ii + dh >= 0) & (ii + dh < H) &
                     (jj + dw >= 0) & (jj + dw < W))
            rows.append(valid.astype(jnp.float32))
    return jnp.stack(rows).reshape(9, 1, H * W)


def basic_block_forward(x_nchw, params):
    """BasicBlock forward. x_nchw: (N, C, H, W) like PyTorch."""
    N, C, H, W = x_nchw.shape
    HW = H * W

    s1, b1 = _fold_bn(*params["bn1"])
    s2, b2 = _fold_bn(*params["bn2"])
    w1 = _fold_weight(params["w1"], s1)
    w2 = _fold_weight(params["w2"], s2)
    b1c = b1.reshape(C, 1).astype(jnp.float32)
    b2c = b2.reshape(C, 1).astype(jnp.float32)
    masks = _make_tap_masks(H, W)

    x_flat = x_nchw.reshape(N, C, HW).astype(jnp.float32)   # free view of NCHW

    kernel = functools.partial(basic_block_kernel, H=H, W=W)
    out_flat = pl.pallas_call(
        kernel,
        out_shape=jax.ShapeDtypeStruct((N, C, HW), jnp.float32),
        grid_spec=pltpu.PrefetchScalarGridSpec(
            num_scalar_prefetch=0,
            grid=(N,),
            in_specs=[
                pl.BlockSpec((1, C, HW), lambda n: (n, 0, 0)),   # x (lane-dense)
                pl.BlockSpec((9, C, C), lambda n: (0, 0, 0)),    # w1 folded
                pl.BlockSpec((C, 1), lambda n: (0, 0)),          # bn1 bias
                pl.BlockSpec((9, C, C), lambda n: (0, 0, 0)),    # w2 folded
                pl.BlockSpec((C, 1), lambda n: (0, 0)),          # bn2 bias
                pl.BlockSpec((9, 1, HW), lambda n: (0, 0, 0)),   # tap masks
            ],
            out_specs=pl.BlockSpec((1, C, HW), lambda n: (n, 0, 0)),
        ),
        compiler_params=pltpu.CompilerParams(
            dimension_semantics=("parallel",)),
    )(x_flat, w1, b1c, w2, b2c, masks)
    return out_flat.reshape(N, C, H, W)


def _reference(x_nchw, params):
    """Pure-JAX reference (lax conv) for verification."""
    def conv(x, w_oihw):
        return jax.lax.conv_general_dilated(
            x, w_oihw, window_strides=(1, 1), padding=((1, 1), (1, 1)),
            dimension_numbers=("NCHW", "OIHW", "NCHW"))

    def bn(x, p):
        g, b, m, v = p
        s = g / jnp.sqrt(v + 1e-5)
        bb = b - m * s
        return x * s[None, :, None, None] + bb[None, :, None, None]

    out = jax.nn.relu(bn(conv(x_nchw, params["w1"]), params["bn1"]))
    out = bn(conv(out, params["w2"]), params["bn2"])
    return jax.nn.relu(out + x_nchw)


if __name__ == "__main__":
    # Small shapes: inplanes == planes == 4 (stride=1, downsample=None).
    N, C, H, W = 2, 4, 16, 16
    key = jax.random.PRNGKey(0)
    k_x, k_w1, k_w2, k_bn = jax.random.split(key, 4)

    x = jax.random.normal(k_x, (N, C, H, W), dtype=jnp.float32)

    # conv weights in PyTorch layout (Cout, Cin, KH, KW), bias=False
    w1 = jax.random.normal(k_w1, (C, C, 3, 3), dtype=jnp.float32) * 0.1
    w2 = jax.random.normal(k_w2, (C, C, 3, 3), dtype=jnp.float32) * 0.1

    # BatchNorm params (eval mode: running stats)
    kb1, kb2, km1, km2 = jax.random.split(k_bn, 4)
    bn1 = (jnp.ones((C,), jnp.float32) * 1.1,                    # gamma
           jax.random.normal(kb1, (C,), jnp.float32) * 0.05,     # beta
           jax.random.normal(km1, (C,), jnp.float32) * 0.1,      # running mean
           jnp.ones((C,), jnp.float32) * 0.9)                    # running var
    bn2 = (jnp.ones((C,), jnp.float32) * 0.95,
           jax.random.normal(kb2, (C,), jnp.float32) * 0.05,
           jax.random.normal(km2, (C,), jnp.float32) * 0.1,
           jnp.ones((C,), jnp.float32) * 1.05)

    params = {"w1": w1, "w2": w2, "bn1": bn1, "bn2": bn2}

    out = jax.block_until_ready(basic_block_forward(x, params))
    ref = jax.block_until_ready(_reference(x, params))

    assert out.shape == (N, C, H, W)
    assert jnp.allclose(out, ref, atol=1e-4, rtol=1e-4), (
        float(jnp.max(jnp.abs(out - ref))))

    print("KERNEL_OK")
</pallas_src>

<mosaic_0001>
module attributes {stable_mosaic.version = 11 : i64} {
  func.func @basic_block_kernel(%arg0: i32, %arg1: memref<1x4x256xf32, #tpu.memory_space<vmem>>, %arg2: memref<9x4x4xf32, #tpu.memory_space<vmem>>, %arg3: memref<4x1xf32, #tpu.memory_space<vmem>>, %arg4: memref<9x4x4xf32, #tpu.memory_space<vmem>>, %arg5: memref<4x1xf32, #tpu.memory_space<vmem>>, %arg6: memref<9x1x256xf32, #tpu.memory_space<vmem>>, %arg7: memref<1x4x256xf32, #tpu.memory_space<vmem>>) attributes {dimension_semantics = [#tpu.dimension_semantics<parallel>], iteration_bounds = array<i64: 2>, scalar_prefetch = 0 : i64, scratch_operands = 0 : i64, tpu.core_type = #tpu.core_type<tc>, window_params = [{transform_indices = @transform_0, window_bounds = array<i64: 1, 4, 256>}, {pipeline_mode = #tpu.pipeline_mode<synchronous>, transform_indices = @transform_1, window_bounds = array<i64: 9, 4, 4>}, {pipeline_mode = #tpu.pipeline_mode<synchronous>, transform_indices = @transform_2, window_bounds = array<i64: 4, 1>}, {pipeline_mode = #tpu.pipeline_mode<synchronous>, transform_indices = @transform_3, window_bounds = array<i64: 9, 4, 4>}, {pipeline_mode = #tpu.pipeline_mode<synchronous>, transform_indices = @transform_4, window_bounds = array<i64: 4, 1>}, {pipeline_mode = #tpu.pipeline_mode<synchronous>, transform_indices = @transform_5, window_bounds = array<i64: 9, 1, 256>}, {transform_indices = @transform_6, window_bounds = array<i64: 1, 4, 256>}]} {
    %c0 = arith.constant 0 : index
    %c0_0 = arith.constant 0 : index
    %c0_1 = arith.constant 0 : index
    %0 = vector.load %arg1[%c0, %c0_0, %c0_1] : memref<1x4x256xf32, #tpu.memory_space<vmem>>, vector<1x4x256xf32>
    %1 = vector.shape_cast %0 : vector<1x4x256xf32> to vector<4x256xf32>
    %cst = arith.constant 0.000000e+00 : f32
    %2 = vector.broadcast %cst : f32 to vector<4x256xf32>
    %c17_i32 = arith.constant 17 : i32
    %3 = tpu.dynamic_rotate %1 by %c17_i32 dim 1 : vector<4x256xf32>, i32 -> vector<4x256xf32>
    %c0_2 = arith.constant 0 : index
    %c0_3 = arith.constant 0 : index
    %c0_4 = arith.constant 0 : index
    %4 = vector.load %arg6[%c0_2, %c0_3, %c0_4] : memref<9x1x256xf32, #tpu.memory_space<vmem>>, vector<1x1x256xf32>
    %5 = vector.shape_cast %4 : vector<1x1x256xf32> to vector<1x256xf32>
    %6 = vector.broadcast %5 : vector<1x256xf32> to vector<4x256xf32>
    %7 = arith.mulf %3, %6 : vector<4x256xf32>
    %c0_5 = arith.constant 0 : index
    %c0_6 = arith.constant 0 : index
    %c0_7 = arith.constant 0 : index
    %8 = vector.load %arg2[%c0_5, %c0_6, %c0_7] : memref<9x4x4xf32, #tpu.memory_space<vmem>>, vector<1x4x4xf32>
    %9 = vector.shape_cast %8 : vector<1x4x4xf32> to vector<4x4xf32>
    %cst_8 = arith.constant dense<0.000000e+00> : vector<4x256xf32>
    %10 = tpu.matmul %9, %7, %cst_8 {dimension_numbers = #tpu.dot_dimension_numbers<[1], [0], [0], [1], [0, 0, 1, 1], [], []>} : vector<4x4xf32>, vector<4x256xf32>, vector<4x256xf32> -> vector<4x256xf32>
    %11 = arith.addf %2, %10 : vector<4x256xf32>
    %c16_i32 = arith.constant 16 : i32
    %12 = tpu.dynamic_rotate %1 by %c16_i32 dim 1 : vector<4x256xf32>, i32 -> vector<4x256xf32>
    %c1 = arith.constant 1 : index
    %c0_9 = arith.constant 0 : index
    %c0_10 = arith.constant 0 : index
    %13 = vector.load %arg6[%c1, %c0_9, %c0_10] : memref<9x1x256xf32, #tpu.memory_space<vmem>>, vector<1x1x256xf32>
    %14 = vector.shape_cast %13 : vector<1x1x256xf32> to vector<1x256xf32>
    %15 = vector.broadcast %14 : vector<1x256xf32> to vector<4x256xf32>
    %16 = arith.mulf %12, %15 : vector<4x256xf32>
    %c1_11 = arith.constant 1 : index
    %c0_12 = arith.constant 0 : index
    %c0_13 = arith.constant 0 : index
    %17 = vector.load %arg2[%c1_11, %c0_12, %c0_13] : memref<9x4x4xf32, #tpu.memory_space<vmem>>, vector<1x4x4xf32>
    %18 = vector.shape_cast %17 : vector<1x4x4xf32> to vector<4x4xf32>
    %cst_14 = arith.constant dense<0.000000e+00> : vector<4x256xf32>
    %19 = tpu.matmul %18, %16, %cst_14 {dimension_numbers = #tpu.dot_dimension_numbers<[1], [0], [0], [1], [0, 0, 1, 1], [], []>} : vector<4x4xf32>, vector<4x256xf32>, vector<4x256xf32> -> vector<4x256xf32>
    %20 = arith.addf %11, %19 : vector<4x256xf32>
    %c15_i32 = arith.constant 15 : i32
    %21 = tpu.dynamic_rotate %1 by %c15_i32 dim 1 : vector<4x256xf32>, i32 -> vector<4x256xf32>
    %c2 = arith.constant 2 : index
    %c0_15 = arith.constant 0 : index
    %c0_16 = arith.constant 0 : index
    %22 = vector.load %arg6[%c2, %c0_15, %c0_16] : memref<9x1x256xf32, #tpu.memory_space<vmem>>, vector<1x1x256xf32>
    %23 = vector.shape_cast %22 : vector<1x1x256xf32> to vector<1x256xf32>
    %24 = vector.broadcast %23 : vector<1x256xf32> to vector<4x256xf32>
    %25 = arith.mulf %21, %24 : vector<4x256xf32>
    %c2_17 = arith.constant 2 : index
    %c0_18 = arith.constant 0 : index
    %c0_19 = arith.constant 0 : index
    %26 = vector.load %arg2[%c2_17, %c0_18, %c0_19] : memref<9x4x4xf32, #tpu.memory_space<vmem>>, vector<1x4x4xf32>
    %27 = vector.shape_cast %26 : vector<1x4x4xf32> to vector<4x4xf32>
    %cst_20 = arith.constant dense<0.000000e+00> : vector<4x256xf32>
    %28 = tpu.matmul %27, %25, %cst_20 {dimension_numbers = #tpu.dot_dimension_numbers<[1], [0], [0], [1], [0, 0, 1, 1], [], []>} : vector<4x4xf32>, vector<4x256xf32>, vector<4x256xf32> -> vector<4x256xf32>
    %29 = arith.addf %20, %28 : vector<4x256xf32>
    %c1_i32 = arith.constant 1 : i32
    %30 = tpu.dynamic_rotate %1 by %c1_i32 dim 1 : vector<4x256xf32>, i32 -> vector<4x256xf32>
    %c3 = arith.constant 3 : index
    %c0_21 = arith.constant 0 : index
    %c0_22 = arith.constant 0 : index
    %31 = vector.load %arg6[%c3, %c0_21, %c0_22] : memref<9x1x256xf32, #tpu.memory_space<vmem>>, vector<1x1x256xf32>
    %32 = vector.shape_cast %31 : vector<1x1x256xf32> to vector<1x256xf32>
    %33 = vector.broadcast %32 : vector<1x256xf32> to vector<4x256xf32>
    %34 = arith.mulf %30, %33 : vector<4x256xf32>
    %c3_23 = arith.constant 3 : index
    %c0_24 = arith.constant 0 : index
    %c0_25 = arith.constant 0 : index
    %35 = vector.load %arg2[%c3_23, %c0_24, %c0_25] : memref<9x4x4xf32, #tpu.memory_space<vmem>>, vector<1x4x4xf32>
    %36 = vector.shape_cast %35 : vector<1x4x4xf32> to vector<4x4xf32>
    %cst_26 = arith.constant dense<0.000000e+00> : vector<4x256xf32>
    %37 = tpu.matmul %36, %34, %cst_26 {dimension_numbers = #tpu.dot_dimension_numbers<[1], [0], [0], [1], [0, 0, 1, 1], [], []>} : vector<4x4xf32>, vector<4x256xf32>, vector<4x256xf32> -> vector<4x256xf32>
    %38 = arith.addf %29, %37 : vector<4x256xf32>
    %c4 = arith.constant 4 : index
    %c0_27 = arith.constant 0 : index
    %c0_28 = arith.constant 0 : index
    %39 = vector.load %arg2[%c4, %c0_27, %c0_28] : memref<9x4x4xf32, #tpu.memory_space<vmem>>, vector<1x4x4xf32>
    %40 = vector.shape_cast %39 : vector<1x4x4xf32> to vector<4x4xf32>
    %cst_29 = arith.constant dense<0.000000e+00> : vector<4x256xf32>
    %41 = tpu.matmul %40, %1, %cst_29 {dimension_numbers = #tpu.dot_dimension_numbers<[1], [0], [0], [1], [0, 0, 1, 1], [], []>} : vector<4x4xf32>, vector<4x256xf32>, vector<4x256xf32> -> vector<4x256xf32>
    %42 = arith.addf %38, %41 : vector<4x256xf32>
    %c255_i32 = arith.constant 255 : i32
    %43 = tpu.dynamic_rotate %1 by %c255_i32 dim 1 : vector<4x256xf32>, i32 -> vector<4x256xf32>
    %c5 = arith.constant 5 : index
    %c0_30 = arith.constant 0 : index
    %c0_31 = arith.constant 0 : index
    %44 = vector.load %arg6[%c5, %c0_30, %c0_31] : memref<9x1x256xf32, #tpu.memory_space<vmem>>, vector<1x1x256xf32>
    %45 = vector.shape_cast %44 : vector<1x1x256xf32> to vector<1x256xf32>
    %46 = vector.broadcast %45 : vector<1x256xf32> to vector<4x256xf32>
    %47 = arith.mulf %43, %46 : vector<4x256xf32>
    %c5_32 = arith.constant 5 : index
    %c0_33 = arith.constant 0 : index
    %c0_34 = arith.constant 0 : index
    %48 = vector.load %arg2[%c5_32, %c0_33, %c0_34] : memref<9x4x4xf32, #tpu.memory_space<vmem>>, vector<1x4x4xf32>
    %49 = vector.shape_cast %48 : vector<1x4x4xf32> to vector<4x4xf32>
    %cst_35 = arith.constant dense<0.000000e+00> : vector<4x256xf32>
    %50 = tpu.matmul %49, %47, %cst_35 {dimension_numbers = #tpu.dot_dimension_numbers<[1], [0], [0], [1], [0, 0, 1, 1], [], []>} : vector<4x4xf32>, vector<4x256xf32>, vector<4x256xf32> -> vector<4x256xf32>
    %51 = arith.addf %42, %50 : vector<4x256xf32>
    %c241_i32 = arith.constant 241 : i32
    %52 = tpu.dynamic_rotate %1 by %c241_i32 dim 1 : vector<4x256xf32>, i32 -> vector<4x256xf32>
    %c6 = arith.constant 6 : index
    %c0_36 = arith.constant 0 : index
    %c0_37 = arith.constant 0 : index
    %53 = vector.load %arg6[%c6, %c0_36, %c0_37] : memref<9x1x256xf32, #tpu.memory_space<vmem>>, vector<1x1x256xf32>
    %54 = vector.shape_cast %53 : vector<1x1x256xf32> to vector<1x256xf32>
    %55 = vector.broadcast %54 : vector<1x256xf32> to vector<4x256xf32>
    %56 = arith.mulf %52, %55 : vector<4x256xf32>
    %c6_38 = arith.constant 6 : index
    %c0_39 = arith.constant 0 : index
    %c0_40 = arith.constant 0 : index
    %57 = vector.load %arg2[%c6_38, %c0_39, %c0_40] : memref<9x4x4xf32, #tpu.memory_space<vmem>>, vector<1x4x4xf32>
    %58 = vector.shape_cast %57 : vector<1x4x4xf32> to vector<4x4xf32>
    %cst_41 = arith.constant dense<0.000000e+00> : vector<4x256xf32>
    %59 = tpu.matmul %58, %56, %cst_41 {dimension_numbers = #tpu.dot_dimension_numbers<[1], [0], [0], [1], [0, 0, 1, 1], [], []>} : vector<4x4xf32>, vector<4x256xf32>, vector<4x256xf32> -> vector<4x256xf32>
    %60 = arith.addf %51, %59 : vector<4x256xf32>
    %c240_i32 = arith.constant 240 : i32
    %61 = tpu.dynamic_rotate %1 by %c240_i32 dim 1 : vector<4x256xf32>, i32 -> vector<4x256xf32>
    %c7 = arith.constant 7 : index
    %c0_42 = arith.constant 0 : index
    %c0_43 = arith.constant 0 : index
    %62 = vector.load %arg6[%c7, %c0_42, %c0_43] : memref<9x1x256xf32, #tpu.memory_space<vmem>>, vector<1x1x256xf32>
    %63 = vector.shape_cast %62 : vector<1x1x256xf32> to vector<1x256xf32>
    %64 = vector.broadcast %63 : vector<1x256xf32> to vector<4x256xf32>
    %65 = arith.mulf %61, %64 : vector<4x256xf32>
    %c7_44 = arith.constant 7 : index
    %c0_45 = arith.constant 0 : index
    %c0_46 = arith.constant 0 : index
    %66 = vector.load %arg2[%c7_44, %c0_45, %c0_46] : memref<9x4x4xf32, #tpu.memory_space<vmem>>, vector<1x4x4xf32>
    %67 = vector.shape_cast %66 : vector<1x4x4xf32> to vector<4x4xf32>
    %cst_47 = arith.constant dense<0.000000e+00> : vector<4x256xf32>
    %68 = tpu.matmul %67, %65, %cst_47 {dimension_numbers = #tpu.dot_dimension_numbers<[1], [0], [0], [1], [0, 0, 1, 1], [], []>} : vector<4x4xf32>, vector<4x256xf32>, vector<4x256xf32> -> vector<4x256xf32>
    %69 = arith.addf %60, %68 : vector<4x256xf32>
    %c239_i32 = arith.constant 239 : i32
    %70 = tpu.dynamic_rotate %1 by %c239_i32 dim 1 : vector<4x256xf32>, i32 -> vector<4x256xf32>
    %c8 = arith.constant 8 : index
    %c0_48 = arith.constant 0 : index
    %c0_49 = arith.constant 0 : index
    %71 = vector.load %arg6[%c8, %c0_48, %c0_49] : memref<9x1x256xf32, #tpu.memory_space<vmem>>, vector<1x1x256xf32>
    %72 = vector.shape_cast %71 : vector<1x1x256xf32> to vector<1x256xf32>
    %73 = vector.broadcast %72 : vector<1x256xf32> to vector<4x256xf32>
    %74 = arith.mulf %70, %73 : vector<4x256xf32>
    %c8_50 = arith.constant 8 : index
    %c0_51 = arith.constant 0 : index
    %c0_52 = arith.constant 0 : index
    %75 = vector.load %arg2[%c8_50, %c0_51, %c0_52] : memref<9x4x4xf32, #tpu.memory_space<vmem>>, vector<1x4x4xf32>
    %76 = vector.shape_cast %75 : vector<1x4x4xf32> to vector<4x4xf32>
    %cst_53 = arith.constant dense<0.000000e+00> : vector<4x256xf32>
    %77 = tpu.matmul %76, %74, %cst_53 {dimension_numbers = #tpu.dot_dimension_numbers<[1], [0], [0], [1], [0, 0, 1, 1], [], []>} : vector<4x4xf32>, vector<4x256xf32>, vector<4x256xf32> -> vector<4x256xf32>
    %78 = arith.addf %69, %77 : vector<4x256xf32>
    %c0_54 = arith.constant 0 : index
    %c0_55 = arith.constant 0 : index
    %79 = vector.load %arg3[%c0_54, %c0_55] : memref<4x1xf32, #tpu.memory_space<vmem>>, vector<4x1xf32>
    %80 = vector.broadcast %79 : vector<4x1xf32> to vector<4x256xf32>
    %81 = arith.addf %78, %80 : vector<4x256xf32>
    %cst_56 = arith.constant 0.000000e+00 : f32
    %82 = vector.broadcast %cst_56 : f32 to vector<4x256xf32>
    %83 = arith.maximumf %81, %82 : vector<4x256xf32>
    %cst_57 = arith.constant 0.000000e+00 : f32
    %84 = vector.broadcast %cst_57 : f32 to vector<4x256xf32>
    %c17_i32_58 = arith.constant 17 : i32
    %85 = tpu.dynamic_rotate %83 by %c17_i32_58 dim 1 : vector<4x256xf32>, i32 -> vector<4x256xf32>
    %c0_59 = arith.constant 0 : index
    %c0_60 = arith.constant 0 : index
    %c0_61 = arith.constant 0 : index
    %86 = vector.load %arg6[%c0_59, %c0_60, %c0_61] : memref<9x1x256xf32, #tpu.memory_space<vmem>>, vector<1x1x256xf32>
    %87 = vector.shape_cast %86 : vector<1x1x256xf32> to vector<1x256xf32>
    %88 = vector.broadcast %87 : vector<1x256xf32> to vector<4x256xf32>
    %89 = arith.mulf %85, %88 : vector<4x256xf32>
    %c0_62 = arith.constant 0 : index
    %c0_63 = arith.constant 0 : index
    %c0_64 = arith.constant 0 : index
    %90 = vector.load %arg4[%c0_62, %c0_63, %c0_64] : memref<9x4x4xf32, #tpu.memory_space<vmem>>, vector<1x4x4xf32>
    %91 = vector.shape_cast %90 : vector<1x4x4xf32> to vector<4x4xf32>
    %cst_65 = arith.constant dense<0.000000e+00> : vector<4x256xf32>
    %92 = tpu.matmul %91, %89, %cst_65 {dimension_numbers = #tpu.dot_dimension_numbers<[1], [0], [0], [1], [0, 0, 1, 1], [], []>} : vector<4x4xf32>, vector<4x256xf32>, vector<4x256xf32> -> vector<4x256xf32>
    %93 = arith.addf %84, %92 : vector<4x256xf32>
    %c16_i32_66 = arith.constant 16 : i32
    %94 = tpu.dynamic_rotate %83 by %c16_i32_66 dim 1 : vector<4x256xf32>, i32 -> vector<4x256xf32>
    %c1_67 = arith.constant 1 : index
    %c0_68 = arith.constant 0 : index
    %c0_69 = arith.constant 0 : index
    %95 = vector.load %arg6[%c1_67, %c0_68, %c0_69] : memref<9x1x256xf32, #tpu.memory_space<vmem>>, vector<1x1x256xf32>
    %96 = vector.shape_cast %95 : vector<1x1x256xf32> to vector<1x256xf32>
    %97 = vector.broadcast %96 : vector<1x256xf32> to vector<4x256xf32>
    %98 = arith.mulf %94, %97 : vector<4x256xf32>
    %c1_70 = arith.constant 1 : index
    %c0_71 = arith.constant 0 : index
    %c0_72 = arith.constant 0 : index
    %99 = vector.load %arg4[%c1_70, %c0_71, %c0_72] : memref<9x4x4xf32, #tpu.memory_space<vmem>>, vector<1x4x4xf32>
    %100 = vector.shape_cast %99 : vector<1x4x4xf32> to vector<4x4xf32>
    %cst_73 = arith.constant dense<0.000000e+00> : vector<4x256xf32>
    %101 = tpu.matmul %100, %98, %cst_73 {dimension_numbers = #tpu.dot_dimension_numbers<[1], [0], [0], [1], [0, 0, 1, 1], [], []>} : vector<4x4xf32>, vector<4x256xf32>, vector<4x256xf32> -> vector<4x256xf32>
    %102 = arith.addf %93, %101 : vector<4x256xf32>
    %c15_i32_74 = arith.constant 15 : i32
    %103 = tpu.dynamic_rotate %83 by %c15_i32_74 dim 1 : vector<4x256xf32>, i32 -> vector<4x256xf32>
    %c2_75 = arith.constant 2 : index
    %c0_76 = arith.constant 0 : index
    %c0_77 = arith.constant 0 : index
    %104 = vector.load %arg6[%c2_75, %c0_76, %c0_77] : memref<9x1x256xf32, #tpu.memory_space<vmem>>, vector<1x1x256xf32>
    %105 = vector.shape_cast %104 : vector<1x1x256xf32> to vector<1x256xf32>
    %106 = vector.broadcast %105 : vector<1x256xf32> to vector<4x256xf32>
    %107 = arith.mulf %103, %106 : vector<4x256xf32>
    %c2_78 = arith.constant 2 : index
    %c0_79 = arith.constant 0 : index
    %c0_80 = arith.constant 0 : index
    %108 = vector.load %arg4[%c2_78, %c0_79, %c0_80] : memref<9x4x4xf32, #tpu.memory_space<vmem>>, vector<1x4x4xf32>
    %109 = vector.shape_cast %108 : vector<1x4x4xf32> to vector<4x4xf32>
    %cst_81 = arith.constant dense<0.000000e+00> : vector<4x256xf32>
    %110 = tpu.matmul %109, %107, %cst_81 {dimension_numbers = #tpu.dot_dimension_numbers<[1], [0], [0], [1], [0, 0, 1, 1], [], []>} : vector<4x4xf32>, vector<4x256xf32>, vector<4x256xf32> -> vector<4x256xf32>
    %111 = arith.addf %102, %110 : vector<4x256xf32>
    %c1_i32_82 = arith.constant 1 : i32
    %112 = tpu.dynamic_rotate %83 by %c1_i32_82 dim 1 : vector<4x256xf32>, i32 -> vector<4x256xf32>
    %c3_83 = arith.constant 3 : index
    %c0_84 = arith.constant 0 : index
    %c0_85 = arith.constant 0 : index
    %113 = vector.load %arg6[%c3_83, %c0_84, %c0_85] : memref<9x1x256xf32, #tpu.memory_space<vmem>>, vector<1x1x256xf32>
    %114 = vector.shape_cast %113 : vector<1x1x256xf32> to vector<1x256xf32>
    %115 = vector.broadcast %114 : vector<1x256xf32> to vector<4x256xf32>
    %116 = arith.mulf %112, %115 : vector<4x256xf32>
    %c3_86 = arith.constant 3 : index
    %c0_87 = arith.constant 0 : index
    %c0_88 = arith.constant 0 : index
    %117 = vector.load %arg4[%c3_86, %c0_87, %c0_88] : memref<9x4x4xf32, #tpu.memory_space<vmem>>, vector<1x4x4xf32>
    %118 = vector.shape_cast %117 : vector<1x4x4xf32> to vector<4x4xf32>
    %cst_89 = arith.constant dense<0.000000e+00> : vector<4x256xf32>
    %119 = tpu.matmul %118, %116, %cst_89 {dimension_numbers = #tpu.dot_dimension_numbers<[1], [0], [0], [1], [0, 0, 1, 1], [], []>} : vector<4x4xf32>, vector<4x256xf32>, vector<4x256xf32> -> vector<4x256xf32>
    %120 = arith.addf %111, %119 : vector<4x256xf32>
    %c4_90 = arith.constant 4 : index
    %c0_91 = arith.constant 0 : index
    %c0_92 = arith.constant 0 : index
    %121 = vector.load %arg4[%c4_90, %c0_91, %c0_92] : memref<9x4x4xf32, #tpu.memory_space<vmem>>, vector<1x4x4xf32>
    %122 = vector.shape_cast %121 : vector<1x4x4xf32> to vector<4x4xf32>
    %cst_93 = arith.constant dense<0.000000e+00> : vector<4x256xf32>
    %123 = tpu.matmul %122, %83, %cst_93 {dimension_numbers = #tpu.dot_dimension_numbers<[1], [0], [0], [1], [0, 0, 1, 1], [], []>} : vector<4x4xf32>, vector<4x256xf32>, vector<4x256xf32> -> vector<4x256xf32>
    %124 = arith.addf %120, %123 : vector<4x256xf32>
    %c255_i32_94 = arith.constant 255 : i32
    %125 = tpu.dynamic_rotate %83 by %c255_i32_94 dim 1 : vector<4x256xf32>, i32 -> vector<4x256xf32>
    %c5_95 = arith.constant 5 : index
    %c0_96 = arith.constant 0 : index
    %c0_97 = arith.constant 0 : index
    %126 = vector.load %arg6[%c5_95, %c0_96, %c0_97] : memref<9x1x256xf32, #tpu.memory_space<vmem>>, vector<1x1x256xf32>
    %127 = vector.shape_cast %126 : vector<1x1x256xf32> to vector<1x256xf32>
    %128 = vector.broadcast %127 : vector<1x256xf32> to vector<4x256xf32>
    %129 = arith.mulf %125, %128 : vector<4x256xf32>
    %c5_98 = arith.constant 5 : index
    %c0_99 = arith.constant 0 : index
    %c0_100 = arith.constant 0 : index
    %130 = vector.load %arg4[%c5_98, %c0_99, %c0_100] : memref<9x4x4xf32, #tpu.memory_space<vmem>>, vector<1x4x4xf32>
    %131 = vector.shape_cast %130 : vector<1x4x4xf32> to vector<4x4xf32>
    %cst_101 = arith.constant dense<0.000000e+00> : vector<4x256xf32>
    %132 = tpu.matmul %131, %129, %cst_101 {dimension_numbers = #tpu.dot_dimension_numbers<[1], [0], [0], [1], [0, 0, 1, 1], [], []>} : vector<4x4xf32>, vector<4x256xf32>, vector<4x256xf32> -> vector<4x256xf32>
    %133 = arith.addf %124, %132 : vector<4x256xf32>
    %c241_i32_102 = arith.constant 241 : i32
    %134 = tpu.dynamic_rotate %83 by %c241_i32_102 dim 1 : vector<4x256xf32>, i32 -> vector<4x256xf32>
    %c6_103 = arith.constant 6 : index
    %c0_104 = arith.constant 0 : index
    %c0_105 = arith.constant 0 : index
    %135 = vector.load %arg6[%c6_103, %c0_104, %c0_105] : memref<9x1x256xf32, #tpu.memory_space<vmem>>, vector<1x1x256xf32>
    %136 = vector.shape_cast %135 : vector<1x1x256xf32> to vector<1x256xf32>
    %137 = vector.broadcast %136 : vector<1x256xf32> to vector<4x256xf32>
    %138 = arith.mulf %134, %137 : vector<4x256xf32>
    %c6_106 = arith.constant 6 : index
    %c0_107 = arith.constant 0 : index
    %c0_108 = arith.constant 0 : index
    %139 = vector.load %arg4[%c6_106, %c0_107, %c0_108] : memref<9x4x4xf32, #tpu.memory_space<vmem>>, vector<1x4x4xf32>
    %140 = vector.shape_cast %139 : vector<1x4x4xf32> to vector<4x4xf32>
    %cst_109 = arith.constant dense<0.000000e+00> : vector<4x256xf32>
    %141 = tpu.matmul %140, %138, %cst_109 {dimension_numbers = #tpu.dot_dimension_numbers<[1], [0], [0], [1], [0, 0, 1, 1], [], []>} : vector<4x4xf32>, vector<4x256xf32>, vector<4x256xf32> -> vector<4x256xf32>
    %142 = arith.addf %133, %141 : vector<4x256xf32>
    %c240_i32_110 = arith.constant 240 : i32
    %143 = tpu.dynamic_rotate %83 by %c240_i32_110 dim 1 : vector<4x256xf32>, i32 -> vector<4x256xf32>
    %c7_111 = arith.constant 7 : index
    %c0_112 = arith.constant 0 : index
    %c0_113 = arith.constant 0 : index
    %144 = vector.load %arg6[%c7_111, %c0_112, %c0_113] : memref<9x1x256xf32, #tpu.memory_space<vmem>>, vector<1x1x256xf32>
    %145 = vector.shape_cast %144 : vector<1x1x256xf32> to vector<1x256xf32>
    %146 = vector.broadcast %145 : vector<1x256xf32> to vector<4x256xf32>
    %147 = arith.mulf %143, %146 : vector<4x256xf32>
    %c7_114 = arith.constant 7 : index
    %c0_115 = arith.constant 0 : index
    %c0_116 = arith.constant 0 : index
    %148 = vector.load %arg4[%c7_114, %c0_115, %c0_116] : memref<9x4x4xf32, #tpu.memory_space<vmem>>, vector<1x4x4xf32>
    %149 = vector.shape_cast %148 : vector<1x4x4xf32> to vector<4x4xf32>
    %cst_117 = arith.constant dense<0.000000e+00> : vector<4x256xf32>
    %150 = tpu.matmul %149, %147, %cst_117 {dimension_numbers = #tpu.dot_dimension_numbers<[1], [0], [0], [1], [0, 0, 1, 1], [], []>} : vector<4x4xf32>, vector<4x256xf32>, vector<4x256xf32> -> vector<4x256xf32>
    %151 = arith.addf %142, %150 : vector<4x256xf32>
    %c239_i32_118 = arith.constant 239 : i32
    %152 = tpu.dynamic_rotate %83 by %c239_i32_118 dim 1 : vector<4x256xf32>, i32 -> vector<4x256xf32>
    %c8_119 = arith.constant 8 : index
    %c0_120 = arith.constant 0 : index
    %c0_121 = arith.constant 0 : index
    %153 = vector.load %arg6[%c8_119, %c0_120, %c0_121] : memref<9x1x256xf32, #tpu.memory_space<vmem>>, vector<1x1x256xf32>
    %154 = vector.shape_cast %153 : vector<1x1x256xf32> to vector<1x256xf32>
    %155 = vector.broadcast %154 : vector<1x256xf32> to vector<4x256xf32>
    %156 = arith.mulf %152, %155 : vector<4x256xf32>
    %c8_122 = arith.constant 8 : index
    %c0_123 = arith.constant 0 : index
    %c0_124 = arith.constant 0 : index
    %157 = vector.load %arg4[%c8_122, %c0_123, %c0_124] : memref<9x4x4xf32, #tpu.memory_space<vmem>>, vector<1x4x4xf32>
    %158 = vector.shape_cast %157 : vector<1x4x4xf32> to vector<4x4xf32>
    %cst_125 = arith.constant dense<0.000000e+00> : vector<4x256xf32>
    %159 = tpu.matmul %158, %156, %cst_125 {dimension_numbers = #tpu.dot_dimension_numbers<[1], [0], [0], [1], [0, 0, 1, 1], [], []>} : vector<4x4xf32>, vector<4x256xf32>, vector<4x256xf32> -> vector<4x256xf32>
    %160 = arith.addf %151, %159 : vector<4x256xf32>
    %c0_126 = arith.constant 0 : index
    %c0_127 = arith.constant 0 : index
    %161 = vector.load %arg5[%c0_126, %c0_127] : memref<4x1xf32, #tpu.memory_space<vmem>>, vector<4x1xf32>
    %162 = vector.broadcast %161 : vector<4x1xf32> to vector<4x256xf32>
    %163 = arith.addf %160, %162 : vector<4x256xf32>
    %164 = arith.addf %163, %1 : vector<4x256xf32>
    %cst_128 = arith.constant 0.000000e+00 : f32
    %165 = vector.broadcast %cst_128 : f32 to vector<4x256xf32>
    %166 = arith.maximumf %164, %165 : vector<4x256xf32>
    %c0_129 = arith.constant 0 : index
    %c0_130 = arith.constant 0 : index
    %c0_131 = arith.constant 0 : index
    %167 = vector.load %arg7[%c0_129, %c0_130, %c0_131] : memref<1x4x256xf32, #tpu.memory_space<vmem>>, vector<1x4x256xf32>
    %168 = vector.shape_cast %167 : vector<1x4x256xf32> to vector<4x256xf32>
    %169 = vector.shape_cast %166 : vector<4x256xf32> to vector<1x4x256xf32>
    tpu.vector_store %arg7[%c0_129, %c0_130, %c0_131], %169 {strides = array<i32>} : memref<1x4x256xf32, #tpu.memory_space<vmem>>, vector<1x4x256xf32>,
    return
  }
  func.func @transform_0(%arg0: i32) -> (i32, i32, i32) {
    %c0_i32 = arith.constant 0 : i32
    %c0_i32_0 = arith.constant 0 : i32
    %c0_i32_1 = arith.constant 0 : i32
    return %arg0, %c0_i32, %c0_i32_0 : i32, i32, i32
  }
  func.func @transform_1(%arg0: i32) -> (i32, i32, i32) {
    %c0_i32 = arith.constant 0 : i32
    %c0_i32_0 = arith.constant 0 : i32
    %c0_i32_1 = arith.constant 0 : i32
    %c0_i32_2 = arith.constant 0 : i32
    return %c0_i32, %c0_i32_0, %c0_i32_1 : i32, i32, i32
  }
  func.func @transform_2(%arg0: i32) -> (i32, i32) {
    %c0_i32 = arith.constant 0 : i32
    %c0_i32_0 = arith.constant 0 : i32
    %c0_i32_1 = arith.constant 0 : i32
    return %c0_i32, %c0_i32_0 : i32, i32
  }
  func.func @transform_3(%arg0: i32) -> (i32, i32, i32) {
    %c0_i32 = arith.constant 0 : i32
    %c0_i32_0 = arith.constant 0 : i32
    %c0_i32_1 = arith.constant 0 : i32
    %c0_i32_2 = arith.constant 0 : i32
    return %c0_i32, %c0_i32_0, %c0_i32_1 : i32, i32, i32
  }
  func.func @transform_4(%arg0: i32) -> (i32, i32) {
    %c0_i32 = arith.constant 0 : i32
    %c0_i32_0 = arith.constant 0 : i32
    %c0_i32_1 = arith.constant 0 : i32
    return %c0_i32, %c0_i32_0 : i32, i32
  }
  func.func @transform_5(%arg0: i32) -> (i32, i32, i32) {
    %c0_i32 = arith.constant 0 : i32
    %c0_i32_0 = arith.constant 0 : i32
    %c0_i32_1 = arith.constant 0 : i32
    %c0_i32_2 = arith.constant 0 : i32
    return %c0_i32, %c0_i32_0, %c0_i32_1 : i32, i32, i32
  }
  func.func @transform_6(%arg0: i32) -> (i32, i32, i32) {
    %c0_i32 = arith.constant 0 : i32
    %c0_i32_0 = arith.constant 0 : i32
    %c0_i32_1 = arith.constant 0 : i32
    return %arg0, %c0_i32, %c0_i32_0 : i32, i32, i32
  }
}

</mosaic_0001>

<llo_original>
// kernel: tpu_custom_call.1
$region0: #{tpu_custom_call.1}
  #allocation0 [shape = 'u32[]', space=smem, size = 0x4, offset = 0x4, fixed_abs, tag = 'smem constant byte address 0x4 - core index']
  #allocation1 [shape = 'u32[144,128]{1,0:T(1,128)}', space=vmem, size = 0x12000, scoped, tag = 'internal scratch']
  %s0 = inlined_call_operand.vmem [shape: f32[2,4,256], index: 0, kind: input, shape index: {}]
  %s1 = inlined_call_operand.vmem [shape: f32[9,4,4], index: 1, kind: input, shape index: {}]
  %s2 = inlined_call_operand.vmem [shape: f32[4,1], index: 2, kind: input, shape index: {}]
  %s3 = inlined_call_operand.vmem [shape: f32[9,4,4], index: 3, kind: input, shape index: {}]
  %s4 = inlined_call_operand.vmem [shape: f32[4,1], index: 4, kind: input, shape index: {}]
  %s5 = inlined_call_operand.vmem [shape: f32[9,1,256], index: 5, kind: input, shape index: {}]
  %s6 = inlined_call_operand.hbm [shape: f32[2,4,256], index: 6, kind: output, shape index: {}]
  %s7 = sld [smem:[#allocation0]]
  $region57: #{tpu_custom_call.1} parent=0
    _
  %s9 = ssub.s32 1, %s7
  %s10 = scalar_select 0, %s9, %s7
  $region1: #{tpu_custom_call.1} parent=0
    #allocation2 [shape = 'u8[8192]{0}', space=vmem, size = 0x2000, scoped, tag = 'output window, operand 0']
    #allocation3 [shape = 's32[2]{0}', space=sflag, size = 0x8, scoped, tag = 'scoped memory for tpu_custom_call.1']
    %11 = vsyncpa [#allocation3], 0
    %s12 = scalar_lea.sflag [#allocation3], 1
    %13 = vsyncpa %s12, 0
    loop: start=0, step=1, limit=4
    $region2: #{tpu_custom_call.1} parent=1 // loop_pre_header
      _
    $region3: #{tpu_custom_call.1} parent=1 // loop_header
      %s15 = sphi 0, %s19
      %p16 = scmp.ge.s32.totalorder %s15, 4
      %s25 = sphi 0, %s27
      %s28 = sphi 0, %s25
      %s29 = sphi 0, %s28
      %s45 = sphi 0, %s29
      %s49 = sphi 0, %s49
      %s51 = sphi 0, %s49
      %s52 = sphi 0, %s51
      %s66 = sphi 0, %s52
      %s70 = sphi 0, %s70
      %s72 = sphi 0, %s70
      %s73 = sphi 0, %s72
      %s87 = sphi 0, %s73
      %s91 = sphi 0, %s91
      %s93 = sphi 0, %s91
      %s94 = sphi 0, %s93
      %s108 = sphi 0, %s94
      %s112 = sphi 0, %s112
      %s114 = sphi 0, %s112
      %s115 = sphi 0, %s114
      %s129 = sphi 0, %s115
      %s133 = sphi 0, %s133
      %s135 = sphi 0, %s133
      %s136 = sphi 0, %s135
      %s150 = sphi 0, %s136
      %s156 = sphi 0, %s158
      %s159 = sphi 0, %s156
      %s160 = sphi 0, %s159
      %s176 = sphi 0, %s160
    $region4: #{tpu_custom_call.1} parent=1 // loop_header_branch
      %18 = sbr.rel (%p16) target = $region8
    $region5: #{tpu_custom_call.1} parent=1 // loop_body
      %s20 = ssub.s32 %s15, 1
      %s21 = ssub.s32 %s15, 2
      %s22 = sadd.s32 %s15, 1
      %s23 = ssub.s32 %s15, %s22
      %p24 = scmp.eq.s32.totalorder %s23, 0
      %s26 = sadd.s32 %s25, 1
      %s27 = scalar_select %p24, %s25, %s26
      %p30 = pneg %p24
      %p31 = scmp.eq.s32.totalorder %s15, 1
      %p32 = por %p30, %p31
      %p33 = scmp.ne.s32.totalorder %s25, %s28
      %p34 = scmp.eq.s32.totalorder %s15, 0
      %p35 = por %p33, %p34
      %p36 = scmp.ne.s32.totalorder %s25, %s28
      %p37 = scmp.eq.s32.totalorder %s20, 1
      %p38 = por %p36, %p37
      %p39 = scmp.ne.s32.totalorder %s28, %s29
      %p40 = scmp.eq.s32.totalorder %s20, 0
      %p41 = por %p39, %p40
      %p42 = scmp.ne.s32.totalorder %s28, %s29
      %p43 = scmp.eq.s32.totalorder %s21, 1
      %p44 = por %p42, %p43
      %p46 = scmp.ne.s32.totalorder %s29, %s45
      %p47 = scmp.eq.s32.totalorder %s21, 0
      %p48 = por %p46, %p47
      %s50 = sadd.s32 %s49, 1
      %p53 = scmp.eq.s32.totalorder %s15, 1
      %p54 = scmp.ne.s32.totalorder %s49, %s51
      %p55 = scmp.eq.s32.totalorder %s15, 0
      %p56 = por %p54, %p55
      %p57 = scmp.ne.s32.totalorder %s49, %s51
      %p58 = scmp.eq.s32.totalorder %s20, 1
      %p59 = por %p57, %p58
      %p60 = scmp.ne.s32.totalorder %s51, %s52
      %p61 = scmp.eq.s32.totalorder %s20, 0
      %p62 = por %p60, %p61
      %p63 = scmp.ne.s32.totalorder %s51, %s52
      %p64 = scmp.eq.s32.totalorder %s21, 1
      %p65 = por %p63, %p64
      %p67 = scmp.ne.s32.totalorder %s52, %s66
      %p68 = scmp.eq.s32.totalorder %s21, 0
      %p69 = por %p67, %p68
      %s71 = sadd.s32 %s70, 1
      %p74 = scmp.eq.s32.totalorder %s15, 1
      %p75 = scmp.ne.s32.totalorder %s70, %s72
      %p76 = scmp.eq.s32.totalorder %s15, 0
      %p77 = por %p75, %p76
      %p78 = scmp.ne.s32.totalorder %s70, %s72
      %p79 = scmp.eq.s32.totalorder %s20, 1
      %p80 = por %p78, %p79
      %p81 = scmp.ne.s32.totalorder %s72, %s73
      %p82 = scmp.eq.s32.totalorder %s20, 0
      %p83 = por %p81, %p82
      %p84 = scmp.ne.s32.totalorder %s72, %s73
      %p85 = scmp.eq.s32.totalorder %s21, 1
      %p86 = por %p84, %p85
      %p88 = scmp.ne.s32.totalorder %s73, %s87
      %p89 = scmp.eq.s32.totalorder %s21, 0
      %p90 = por %p88, %p89
      %s92 = sadd.s32 %s91, 1
      %p95 = scmp.eq.s32.totalorder %s15, 1
      %p96 = scmp.ne.s32.totalorder %s91, %s93
      %p97 = scmp.eq.s32.totalorder %s15, 0
      %p98 = por %p96, %p97
      %p99 = scmp.ne.s32.totalorder %s91, %s93
      %p100 = scmp.eq.s32.totalorder %s20, 1
      %p101 = por %p99, %p100
      %p102 = scmp.ne.s32.totalorder %s93, %s94
      %p103 = scmp.eq.s32.totalorder %s20, 0
      %p104 = por %p102, %p103
      %p105 = scmp.ne.s32.totalorder %s93, %s94
      %p106 = scmp.eq.s32.totalorder %s21, 1
      %p107 = por %p105, %p106
      %p109 = scmp.ne.s32.totalorder %s94, %s108
      %p110 = scmp.eq.s32.totalorder %s21, 0
      %p111 = por %p109, %p110
      %s113 = sadd.s32 %s112, 1
      %p116 = scmp.eq.s32.totalorder %s15, 1
      %p117 = scmp.ne.s32.totalorder %s112, %s114
      %p118 = scmp.eq.s32.totalorder %s15, 0
      %p119 = por %p117, %p118
      %p120 = scmp.ne.s32.totalorder %s112, %s114
      %p121 = scmp.eq.s32.totalorder %s20, 1
      %p122 = por %p120, %p121
      %p123 = scmp.ne.s32.totalorder %s114, %s115
      %p124 = scmp.eq.s32.totalorder %s20, 0
      %p125 = por %p123, %p124
      %p126 = scmp.ne.s32.totalorder %s114, %s115
      %p127 = scmp.eq.s32.totalorder %s21, 1
      %p128 = por %p126, %p127
      %p130 = scmp.ne.s32.totalorder %s115, %s129
      %p131 = scmp.eq.s32.totalorder %s21, 0
      %p132 = por %p130, %p131
      %s134 = sadd.s32 %s133, 1
      %p137 = scmp.eq.s32.totalorder %s15, 1
      %p138 = scmp.ne.s32.totalorder %s133, %s135
      %p139 = scmp.eq.s32.totalorder %s15, 0
      %p140 = por %p138, %p139
      %p141 = scmp.ne.s32.totalorder %s133, %s135
      %p142 = scmp.eq.s32.totalorder %s20, 1
      %p143 = por %p141, %p142
      %p144 = scmp.ne.s32.totalorder %s135, %s136
      %p145 = scmp.eq.s32.totalorder %s20, 0
      %p146 = por %p144, %p145
      %p147 = scmp.ne.s32.totalorder %s135, %s136
      %p148 = scmp.eq.s32.totalorder %s21, 1
      %p149 = por %p147, %p148
      %p151 = scmp.ne.s32.totalorder %s136, %s150
      %p152 = scmp.eq.s32.totalorder %s21, 0
      %p153 = por %p151, %p152
      %s154 = ssub.s32 %s15, %s22
      %p155 = scmp.eq.s32.totalorder %s154, 0
      %s157 = sadd.s32 %s156, 1
      %s158 = scalar_select %p155, %s156, %s157
      %p161 = pneg %p155
      %p162 = scmp.eq.s32.totalorder %s15, 1
      %p163 = por %p161, %p162
      %p164 = scmp.ne.s32.totalorder %s156, %s159
      %p165 = scmp.eq.s32.totalorder %s15, 0
      %p166 = por %p164, %p165
      %p167 = scmp.ne.s32.totalorder %s156, %s159
      %p168 = scmp.eq.s32.totalorder %s20, 1
      %p169 = por %p167, %p168
      %p170 = scmp.ne.s32.totalorder %s159, %s160
      %p171 = scmp.eq.s32.totalorder %s20, 0
      %p172 = por %p170, %p171
      %p173 = scmp.ne.s32.totalorder %s159, %s160
      %p174 = scmp.eq.s32.totalorder %s21, 1
      %p175 = por %p173, %p174
      %p177 = scmp.ne.s32.totalorder %s160, %s176
      %p178 = scmp.eq.s32.totalorder %s21, 0
      %p179 = por %p177, %p178
      %p180 = scmp.le.s32.totalorder 1, %s15
      %p181 = scmp.lt.s32.totalorder %s15, 3
      %p182 = pnand %p180, %p181
      %p183 = pneg %p182
      // Predicated region
      $region9: #{tpu_custom_call.1} parent=5 // pred_check
        _
      $region10: #{tpu_custom_call.1} parent=5 // pred_check_branch
        %185 = sbr.rel (%p182) target = $region12
      $region11: #{tpu_custom_call.1} parent=5 // pred_region
        %s186 = ssub.s32 %s15, 1
        // Predicated region
        $region13: #{tpu_custom_call.1} parent=11 // pred_check
          %p187 = pneg %p62
        $region14: #{tpu_custom_call.1} parent=11 // pred_check_branch
          %189 = sbr.rel (%p187) target = $region16
        $region15: #{tpu_custom_call.1} parent=11 // pred_region
          _
        $region16: #{tpu_custom_call.1} parent=11 // pred_fallthru
          _
        // Predicated region
        $region17: #{tpu_custom_call.1} parent=11 // pred_check
          %p190 = pneg %p83
        $region18: #{tpu_custom_call.1} parent=11 // pred_check_branch
          %192 = sbr.rel (%p190) target = $region20
        $region19: #{tpu_custom_call.1} parent=11 // pred_region
          _
        $region20: #{tpu_custom_call.1} parent=11 // pred_fallthru
          _
        // Predicated region
        $region21: #{tpu_custom_call.1} parent=11 // pred_check
          %p193 = pneg %p104
        $region22: #{tpu_custom_call.1} parent=11 // pred_check_branch
          %195 = sbr.rel (%p193) target = $region24
        $region23: #{tpu_custom_call.1} parent=11 // pred_region
          _
        $region24: #{tpu_custom_call.1} parent=11 // pred_fallthru
          _
        // Predicated region
        $region25: #{tpu_custom_call.1} parent=11 // pred_check
          %p196 = pneg %p125
        $region26: #{tpu_custom_call.1} parent=11 // pred_check_branch
          %198 = sbr.rel (%p196) target = $region28
        $region27: #{tpu_custom_call.1} parent=11 // pred_region
          _
        $region28: #{tpu_custom_call.1} parent=11 // pred_fallthru
          _
        // Predicated region
        $region29: #{tpu_custom_call.1} parent=11 // pred_check
          %p199 = pneg %p146
        $region30: #{tpu_custom_call.1} parent=11 // pred_check_branch
          %201 = sbr.rel (%p199) target = $region32
        $region31: #{tpu_custom_call.1} parent=11 // pred_region
          _
        $region32: #{tpu_custom_call.1} parent=11 // pred_fallthru
          _
      $region12: #{tpu_custom_call.1} parent=5 // pred_fallthru
        _
      %p202 = scmp.lt.s32.totalorder %s15, 2
      // Predicated region
      $region33: #{tpu_custom_call.1} parent=5 // pred_check
        %p203 = pneg %p202
      $region34: #{tpu_custom_call.1} parent=5 // pred_check_branch
        %205 = sbr.rel (%p203) target = $region36
      $region35: #{tpu_custom_call.1} parent=5 // pred_region
        // Predicated region
        $region37: #{tpu_custom_call.1} parent=35 // pred_check
          %p206 = pneg %p35
        $region38: #{tpu_custom_call.1} parent=35 // pred_check_branch
          %208 = sbr.rel (%p206) target = $region40
        $region39: #{tpu_custom_call.1} parent=35 // pred_region
          %p209 = scmp.lt.s32.totalorder %s15, 1
          %s210 = scalar_select %p209, %s15, 1
          %s211 = smul.addr %s210, 2
          %s212 = smul.addr %s211, 4
          %s213 = scalar_lea.vmem %s0, %s212
        $region40: #{tpu_custom_call.1} parent=35 // pred_fallthru
          _
      $region36: #{tpu_custom_call.1} parent=5 // pred_fallthru
        _
      %p214 = scmp.le.s32.totalorder 1, %s15
      %p215 = scmp.lt.s32.totalorder %s15, 3
      %p216 = pnand %p214, %p215
      %p217 = pneg %p216
      // Predicated region
      $region41: #{tpu_custom_call.1} parent=5 // pred_check
        _
      $region42: #{tpu_custom_call.1} parent=5 // pred_check_branch
        %219 = sbr.rel (%p216) target = $region44
      $region43: #{tpu_custom_call.1} parent=5 // pred_region
        %s220 = ssub.s32 %s15, 1
        %p221 = scmp.lt.s32.totalorder %s20, 1
        %s222 = scalar_select %p221, %s20, 1
        %s223 = smul.addr %s222, 2
        %s224 = smul.addr %s223, 4
        %s225 = scalar_lea.vmem %s0, %s224
        %p226 = pneg %p41
        %p227 = pneg %p38
        %p228 = pneg %p62
        %p229 = pneg %p59
        %p230 = pneg %p83
        %p231 = pneg %p80
        %p232 = pneg %p104
        %p233 = pneg %p101
        %p234 = pneg %p125
        %p235 = pneg %p122
        %p236 = pneg %p146
        %p237 = pneg %p143
        %p238 = pneg %p172
        %p239 = pneg %p169
        %s240 = sand.u32 %s159, 1
        %s241 = scalar_lea.sflag [#allocation3], %s240
        %s242 = sand.u32 %s159, 1
        %s243 = smul.addr %s242, 8
        %s244 = scalar_lea.vmem [#allocation2], %s243
        %p245 = scmp.lt.s32.totalorder %s20, 1
        %s246 = scalar_select %p245, %s20, 1
        %s247 = smul.addr %s246, 2
        %s248 = smul.addr %s247, 4
        %s249 = scalar_lea.vmem %s0, %s248
        %v250 = vld [vmem:[%s249] sm:$0xff]
        %v252 = vcombine.high %v250, %v250
        %254 = vrot.lane.b32.xlu0 %v250, 17
        %v255 = vpop.permute.xlu0 %254
        %256 = vrot.lane.b32.xlu0 %v252, 17
        %v257 = vpop.permute.xlu0 %256
        %v258 = vlaneseq
        %v259 = vand.u32 %v258, 127
        %vm260 = vcmp.lt.s32.totalorder %v259, 17
        %v261 = vsel %vm260, %v255, %v257
        %v262 = vsel %vm260, %v257, %v255
        %v263 = vld [vmem:[%s5] sm:$0x3]
        %v265 = vlaneseq
        %v266 = vshrl.u32 %v265, 7
        %v267 = vsub.s32 0, %v266
        %v268 = vrot.slane %v263, %v267
        %v269 = vlaneseq
        %v270 = vshrl.u32 %v269, 7
        %v271 = vsub.s32 1, %v270
        %v272 = vrot.slane %v263, %v271
        %v275 = vmul.f32 %v262, %v268
        %v276 = vmul.f32 %v261, %v272
        %v277 = vld [vmem:[%s1] sm:$0xf]
        %278 = vrot.lane.b32.xlu0 %v250, 16
        %v279 = vpop.permute.xlu0 %278
        %280 = vrot.lane.b32.xlu0 %v252, 16
        %v281 = vpop.permute.xlu0 %280
        %vm282 = vcmp.lt.s32.totalorder %v259, 16
        %v283 = vsel %vm282, %v279, %v281
        %v284 = vsel %vm282, %v281, %v279
        %s285 = scalar_lea.vmem %s5, 2
        %v286 = vld [vmem:[%s285] sm:$0x3]
        %v288 = vlaneseq
        %v289 = vshrl.u32 %v288, 7
        %v290 = vsub.s32 0, %v289
        %v291 = vrot.slane %v286, %v290
        %v292 = vlaneseq
        %v293 = vshrl.u32 %v292, 7
        %v294 = vsub.s32 1, %v293
        %v295 = vrot.slane %v286, %v294
        %v298 = vmul.f32 %v284, %v291
        %v299 = vmul.f32 %v283, %v295
        %s300 = scalar_lea.vmem %s1, 4
        %v301 = vld [vmem:[%s300] sm:$0xf]
        %vm302 = vcmask 31744
        %v304 = vsel %vm302, %v301, 0
        %vm306 = vcmask 1043456
        %v308 = vsel %vm306, %v298, 0
        %v311 = vsel %vm306, %v299, 0
        %313 = vmatprep.subr.mxu0 %v311
        %314 = vmatpush1.msra.mxu0 %v308
        %315 = vmatprep.subr.mxu0 0.0
        %316 = vmatpush1.msra.mxu0 0.0
        %317 = vmatprep.subr.mxu0 0.0
        %318 = vmatpush1.msra.mxu0 0.0
        %319 = vmatprep.subr.mxu0 0.0
        %320 = vmatpush1.msra.mxu0 0.0
        %321 = vmatprep.subr.mxu0 0.0
        %322 = vmatpush1.msra.mxu0 0.0
        %323 = vmatprep.subr.mxu0 0.0
        %324 = vmatpush1.msra.mxu0 0.0
        %325 = vmatprep.subr.mxu0 0.0
        %326 = vmatpush1.msra.mxu0 0.0
        %327 = vmatprep.subr.mxu0 0.0
        %328 = vmatpush1.msra.mxu0 0.0
        %329 = vmatprep.subr.mxu0 0.0
        %330 = vmatpush1.msra.mxu0 0.0
        %331 = vmatprep.subr.mxu0 0.0
        %332 = vmatpush1.msra.mxu0 0.0
        %333 = vmatprep.subr.mxu0 0.0
        %334 = vmatpush1.msra.mxu0 0.0
        %335 = vmatprep.subr.mxu0 0.0
        %336 = vmatpush1.msra.mxu0 0.0
        %337 = vmatprep.subr.mxu0 0.0
        %338 = vmatpush1.msra.mxu0 0.0
        %339 = vmatprep.subr.mxu0 0.0
        %340 = vmatpush1.msra.mxu0 0.0
        %341 = vmatprep.subr.mxu0 0.0
        %342 = vmatpush1.msra.mxu0 0.0
        %343 = vmatprep.subr.mxu0 0.0
        %344 = vmatpush1.msra.mxu0 0.0
        %345 = vmatprep.subr.mxu0 0.0
        %346 = vmatpush1.msra.mxu0 0.0
        %347 = vmatprep.subr.mxu0 0.0
        %348 = vmatpush1.msra.mxu0 0.0
        %349 = vmatprep.subr.mxu0 0.0
        %350 = vmatpush1.msra.mxu0 0.0
        %351 = vmatprep.subr.mxu0 0.0
        %352 = vmatpush1.msra.mxu0 0.0
        %353 = vmatprep.subr.mxu0 0.0
        %354 = vmatpush1.msra.mxu0 0.0
        %355 = vmatprep.subr.mxu0 0.0
        %356 = vmatpush1.msra.mxu0 0.0
        %357 = vmatprep.subr.mxu0 0.0
        %358 = vmatpush1.msra.mxu0 0.0
        %359 = vmatprep.subr.mxu0 0.0
        %360 = vmatpush1.msra.mxu0 0.0
        %361 = vmatprep.subr.mxu0 0.0
        %362 = vmatpush1.msra.mxu0 0.0
        %363 = vmatprep.subr.mxu0 0.0
        %364 = vmatpush1.msra.mxu0 0.0
        %365 = vmatprep.subr.mxu0 0.0
        %366 = vmatpush1.msra.mxu0 0.0
        %367 = vmatprep.subr.mxu0 0.0
        %368 = vmatpush1.msra.mxu0 0.0
        %369 = vmatprep.subr.mxu0 0.0
        %370 = vmatpush1.msra.mxu0 0.0
        %371 = vmatprep.subr.mxu0 0.0
        %372 = vmatpush1.msra.mxu0 0.0
        %373 = vmatprep.subr.mxu0 0.0
        %374 = vmatpush1.msra.mxu0 0.0
        %375 = vmatprep.subr.mxu0 0.0
        %376 = vmatpush1.msra.mxu0 0.0
        %377 = vmatprep.mubr.f32.mxu0 0.0
        %378 = vmatmul.mubr.f32.gmra.mrb[0].mxu0 %v304
        %v379 = vpop.f32.mrb[0].mxu0
        %v380 = vadd.f32 0.0, %v379
        %v381 = vpop.f32.mrb[0].mxu0
        %v382 = vadd.f32 0.0, %v381
        %383 = vdwg.mxu0
        %v385 = vsel %vm302, %v277, 0
        %v388 = vsel %vm306, %v275, 0
        %v391 = vsel %vm306, %v276, 0
        %393 = vmatprep.subr.mxu0 %v391
        %394 = vmatpush1.msra.mxu0 %v388
        %395 = vmatprep.subr.mxu0 0.0
        %396 = vmatpush1.msra.mxu0 0.0
        %397 = vmatprep.subr.mxu0 0.0
        %398 = vmatpush1.msra.mxu0 0.0
        %399 = vmatprep.subr.mxu0 0.0
        %400 = vmatpush1.msra.mxu0 0.0
        %401 = vmatprep.subr.mxu0 0.0
        %402 = vmatpush1.msra.mxu0 0.0
        %403 = vmatprep.subr.mxu0 0.0
        %404 = vmatpush1.msra.mxu0 0.0
        %405 = vmatprep.subr.mxu0 0.0
        %406 = vmatpush1.msra.mxu0 0.0
        %407 = vmatprep.subr.mxu0 0.0
        %408 = vmatpush1.msra.mxu0 0.0
        %409 = vmatprep.subr.mxu0 0.0
        %410 = vmatpush1.msra.mxu0 0.0
        %411 = vmatprep.subr.mxu0 0.0
        %412 = vmatpush1.msra.mxu0 0.0
        %413 = vmatprep.subr.mxu0 0.0
        %414 = vmatpush1.msra.mxu0 0.0
        %415 = vmatprep.subr.mxu0 0.0
        %416 = vmatpush1.msra.mxu0 0.0
        %417 = vmatprep.subr.mxu0 0.0
        %418 = vmatpush1.msra.mxu0 0.0
        %419 = vmatprep.subr.mxu0 0.0
        %420 = vmatpush1.msra.mxu0 0.0
        %421 = vmatprep.subr.mxu0 0.0
        %422 = vmatpush1.msra.mxu0 0.0
        %423 = vmatprep.subr.mxu0 0.0
        %424 = vmatpush1.msra.mxu0 0.0
        %425 = vmatprep.subr.mxu0 0.0
        %426 = vmatpush1.msra.mxu0 0.0
        %427 = vmatprep.subr.mxu0 0.0
        %428 = vmatpush1.msra.mxu0 0.0
        %429 = vmatprep.subr.mxu0 0.0
        %430 = vmatpush1.msra.mxu0 0.0
        %431 = vmatprep.subr.mxu0 0.0
        %432 = vmatpush1.msra.mxu0 0.0
        %433 = vmatprep.subr.mxu0 0.0
        %434 = vmatpush1.msra.mxu0 0.0
        %435 = vmatprep.subr.mxu0 0.0
        %436 = vmatpush1.msra.mxu0 0.0
        %437 = vmatprep.subr.mxu0 0.0
        %438 = vmatpush1.msra.mxu0 0.0
        %439 = vmatprep.subr.mxu0 0.0
        %440 = vmatpush1.msra.mxu0 0.0
        %441 = vmatprep.subr.mxu0 0.0
        %442 = vmatpush1.msra.mxu0 0.0
        %443 = vmatprep.subr.mxu0 0.0
        %444 = vmatpush1.msra.mxu0 0.0
        %445 = vmatprep.subr.mxu0 0.0
        %446 = vmatpush1.msra.mxu0 0.0
        %447 = vmatprep.subr.mxu0 0.0
        %448 = vmatpush1.msra.mxu0 0.0
        %449 = vmatprep.subr.mxu0 0.0
        %450 = vmatpush1.msra.mxu0 0.0
        %451 = vmatprep.subr.mxu0 0.0
        %452 = vmatpush1.msra.mxu0 0.0
        %453 = vmatprep.subr.mxu0 0.0
        %454 = vmatpush1.msra.mxu0 0.0
        %455 = vmatprep.subr.mxu0 0.0
        %456 = vmatpush1.msra.mxu0 0.0
        %457 = vmatprep.mubr.f32.mxu0 0.0
        %458 = vmatmul.mubr.f32.gmra.mrb[0].mxu0 %v385
        %v459 = vpop.f32.mrb[0].mxu0
        %v460 = vadd.f32 %v380, %v459
        %v461 = vpop.f32.mrb[0].mxu0
        %v462 = vadd.f32 %v382, %v461
        %463 = vdwg.mxu0
        %464 = vrot.lane.b32.xlu0 %v250, 15
        %v465 = vpop.permute.xlu0 %464
        %466 = vrot.lane.b32.xlu0 %v252, 15
        %v467 = vpop.permute.xlu0 %466
        %vm468 = vcmp.lt.s32.totalorder %v259, 15
        %v469 = vsel %vm468, %v465, %v467
        %v470 = vsel %vm468, %v467, %v465
        %s471 = scalar_lea.vmem %s5, 4
        %v472 = vld [vmem:[%s471] sm:$0x3]
        %v474 = vlaneseq
        %v475 = vshrl.u32 %v474, 7
        %v476 = vsub.s32 0, %v475
        %v477 = vrot.slane %v472, %v476
        %v478 = vlaneseq
        %v479 = vshrl.u32 %v478, 7
        %v480 = vsub.s32 1, %v479
        %v481 = vrot.slane %v472, %v480
        %v484 = vmul.f32 %v470, %v477
        %v485 = vmul.f32 %v469, %v481
        %s486 = scalar_lea.vmem %s1, 8
        %v487 = vld [vmem:[%s486] sm:$0xf]
        %v489 = vsel %vm302, %v487, 0
        %v492 = vsel %vm306, %v484, 0
        %v495 = vsel %vm306, %v485, 0
        %497 = vmatprep.subr.mxu0 %v495
        %498 = vmatpush1.msra.mxu0 %v492
        %499 = vmatprep.subr.mxu0 0.0
        %500 = vmatpush1.msra.mxu0 0.0
        %501 = vmatprep.subr.mxu0 0.0
        %502 = vmatpush1.msra.mxu0 0.0
        %503 = vmatprep.subr.mxu0 0.0
        %504 = vmatpush1.msra.mxu0 0.0
        %505 = vmatprep.subr.mxu0 0.0
        %506 = vmatpush1.msra.mxu0 0.0
        %507 = vmatprep.subr.mxu0 0.0
        %508 = vmatpush1.msra.mxu0 0.0
        %509 = vmatprep.subr.mxu0 0.0
        %510 = vmatpush1.msra.mxu0 0.0
        %511 = vmatprep.subr.mxu0 0.0
        %512 = vmatpush1.msra.mxu0 0.0
        %513 = vmatprep.subr.mxu0 0.0
        %514 = vmatpush1.msra.mxu0 0.0
        %515 = vmatprep.subr.mxu0 0.0
        %516 = vmatpush1.msra.mxu0 0.0
        %517 = vmatprep.subr.mxu0 0.0
        %518 = vmatpush1.msra.mxu0 0.0
        %519 = vmatprep.subr.mxu0 0.0
        %520 = vmatpush1.msra.mxu0 0.0
        %521 = vmatprep.subr.mxu0 0.0
        %522 = vmatpush1.msra.mxu0 0.0
        %523 = vmatprep.subr.mxu0 0.0
        %524 = vmatpush1.msra.mxu0 0.0
        %525 = vmatprep.subr.mxu0 0.0
        %526 = vmatpush1.msra.mxu0 0.0
        %527 = vmatprep.subr.mxu0 0.0
        %528 = vmatpush1.msra.mxu0 0.0
        %529 = vmatprep.subr.mxu0 0.0
        %530 = vmatpush1.msra.mxu0 0.0
        %531 = vmatprep.subr.mxu0 0.0
        %532 = vmatpush1.msra.mxu0 0.0
        %533 = vmatprep.subr.mxu0 0.0
        %534 = vmatpush1.msra.mxu0 0.0
        %535 = vmatprep.subr.mxu0 0.0
        %536 = vmatpush1.msra.mxu0 0.0
        %537 = vmatprep.subr.mxu0 0.0
        %538 = vmatpush1.msra.mxu0 0.0
        %539 = vmatprep.subr.mxu0 0.0
        %540 = vmatpush1.msra.mxu0 0.0
        %541 = vmatprep.subr.mxu0 0.0
        %542 = vmatpush1.msra.mxu0 0.0
        %543 = vmatprep.subr.mxu0 0.0
        %544 = vmatpush1.msra.mxu0 0.0
        %545 = vmatprep.subr.mxu0 0.0
        %546 = vmatpush1.msra.mxu0 0.0
        %547 = vmatprep.subr.mxu0 0.0
        %548 = vmatpush1.msra.mxu0 0.0
        %549 = vmatprep.subr.mxu0 0.0
        %550 = vmatpush1.msra.mxu0 0.0
        %551 = vmatprep.subr.mxu0 0.0
        %552 = vmatpush1.msra.mxu0 0.0
        %553 = vmatprep.subr.mxu0 0.0
        %554 = vmatpush1.msra.mxu0 0.0
        %555 = vmatprep.subr.mxu0 0.0
        %556 = vmatpush1.msra.mxu0 0.0
        %557 = vmatprep.subr.mxu0 0.0
        %558 = vmatpush1.msra.mxu0 0.0
        %559 = vmatprep.subr.mxu0 0.0
        %560 = vmatpush1.msra.mxu0 0.0
        %561 = vmatprep.mubr.f32.mxu0 0.0
        %562 = vmatmul.mubr.f32.gmra.mrb[0].mxu0 %v489
        %v563 = vpop.f32.mrb[0].mxu0
        %v564 = vadd.f32 0.0, %v563
        %v565 = vpop.f32.mrb[0].mxu0
        %v566 = vadd.f32 0.0, %v565
        %567 = vdwg.mxu0
        %v568 = vadd.f32 %v460, %v564
        %v569 = vadd.f32 %v462, %v566
        %570 = vrot.lane.b32.xlu0 %v250, 1
        %v571 = vpop.permute.xlu0 %570
        %572 = vrot.lane.b32.xlu0 %v252, 1
        %v573 = vpop.permute.xlu0 %572
        %vm574 = vcmp.lt.s32.totalorder %v259, 1
        %v575 = vsel %vm574, %v571, %v573
        %v576 = vsel %vm574, %v573, %v571
        %s577 = scalar_lea.vmem %s5, 6
        %v578 = vld [vmem:[%s577] sm:$0x3]
        %v580 = vlaneseq
        %v581 = vshrl.u32 %v580, 7
        %v582 = vsub.s32 0, %v581
        %v583 = vrot.slane %v578, %v582
        %v584 = vlaneseq
        %v585 = vshrl.u32 %v584, 7
        %v586 = vsub.s32 1, %v585
        %v587 = vrot.slane %v578, %v586
        %v590 = vmul.f32 %v576, %v583
        %v591 = vmul.f32 %v575, %v587
        %s592 = scalar_lea.vmem %s1, 12
        %v593 = vld [vmem:[%s592] sm:$0xf]
        %v595 = vsel %vm302, %v593, 0
        %v598 = vsel %vm306, %v590, 0
        %v601 = vsel %vm306, %v591, 0
        %603 = vmatprep.subr.mxu0 %v601
        %604 = vmatpush1.msra.mxu0 %v598
        %605 = vmatprep.subr.mxu0 0.0
        %606 = vmatpush1.msra.mxu0 0.0
        %607 = vmatprep.subr.mxu0 0.0
        %608 = vmatpush1.msra.mxu0 0.0
        %609 = vmatprep.subr.mxu0 0.0
        %610 = vmatpush1.msra.mxu0 0.0
        %611 = vmatprep.subr.mxu0 0.0
        %612 = vmatpush1.msra.mxu0 0.0
        %613 = vmatprep.subr.mxu0 0.0
        %614 = vmatpush1.msra.mxu0 0.0
        %615 = vmatprep.subr.mxu0 0.0
        %616 = vmatpush1.msra.mxu0 0.0
        %617 = vmatprep.subr.mxu0 0.0
        %618 = vmatpush1.msra.mxu0 0.0
        %619 = vmatprep.subr.mxu0 0.0
        %620 = vmatpush1.msra.mxu0 0.0
        %621 = vmatprep.subr.mxu0 0.0
        %622 = vmatpush1.msra.mxu0 0.0
        %623 = vmatprep.subr.mxu0 0.0
        %624 = vmatpush1.msra.mxu0 0.0
        %625 = vmatprep.subr.mxu0 0.0
        %626 = vmatpush1.msra.mxu0 0.0
        %627 = vmatprep.subr.mxu0 0.0
        %628 = vmatpush1.msra.mxu0 0.0
        %629 = vmatprep.subr.mxu0 0.0
        %630 = vmatpush1.msra.mxu0 0.0
        %631 = vmatprep.subr.mxu0 0.0
        %632 = vmatpush1.msra.mxu0 0.0
        %633 = vmatprep.subr.mxu0 0.0
        %634 = vmatpush1.msra.mxu0 0.0
        %635 = vmatprep.subr.mxu0 0.0
        %636 = vmatpush1.msra.mxu0 0.0
        %637 = vmatprep.subr.mxu0 0.0
        %638 = vmatpush1.msra.mxu0 0.0
        %639 = vmatprep.subr.mxu0 0.0
        %640 = vmatpush1.msra.mxu0 0.0
        %641 = vmatprep.subr.mxu0 0.0
        %642 = vmatpush1.msra.mxu0 0.0
        %643 = vmatprep.subr.mxu0 0.0
        %644 = vmatpush1.msra.mxu0 0.0
        %645 = vmatprep.subr.mxu0 0.0
        %646 = vmatpush1.msra.mxu0 0.0
        %647 = vmatprep.subr.mxu0 0.0
        %648 = vmatpush1.msra.mxu0 0.0
        %649 = vmatprep.subr.mxu0 0.0
        %650 = vmatpush1.msra.mxu0 0.0
        %651 = vmatprep.subr.mxu0 0.0
        %652 = vmatpush1.msra.mxu0 0.0
        %653 = vmatprep.subr.mxu0 0.0
        %654 = vmatpush1.msra.mxu0 0.0
        %655 = vmatprep.subr.mxu0 0.0
        %656 = vmatpush1.msra.mxu0 0.0
        %657 = vmatprep.subr.mxu0 0.0
        %658 = vmatpush1.msra.mxu0 0.0
        %659 = vmatprep.subr.mxu0 0.0
        %660 = vmatpush1.msra.mxu0 0.0
        %661 = vmatprep.subr.mxu0 0.0
        %662 = vmatpush1.msra.mxu0 0.0
        %663 = vmatprep.subr.mxu0 0.0
        %664 = vmatpush1.msra.mxu0 0.0
        %665 = vmatprep.subr.mxu0 0.0
        %666 = vmatpush1.msra.mxu0 0.0
        %667 = vmatprep.mubr.f32.mxu0 0.0
        %668 = vmatmul.mubr.f32.gmra.mrb[0].mxu0 %v595
        %v669 = vpop.f32.mrb[0].mxu0
        %v670 = vadd.f32 0.0, %v669
        %v671 = vpop.f32.mrb[0].mxu0
        %v672 = vadd.f32 0.0, %v671
        %673 = vdwg.mxu0
        %v674 = vadd.f32 %v568, %v670
        %v675 = vadd.f32 %v569, %v672
        %s676 = scalar_lea.vmem %s1, 16
        %v677 = vld [vmem:[%s676] sm:$0xf]
        %v679 = vsel %vm302, %v677, 0
        %v681 = vsel %vm306, %v250, 0
        %v683 = vsel %vm306, %v252, 0
        %685 = vmatprep.subr.mxu0 %v683
        %686 = vmatpush1.msra.mxu0 %v681
        %687 = vmatprep.subr.mxu0 0.0
        %688 = vmatpush1.msra.mxu0 0.0
        %689 = vmatprep.subr.mxu0 0.0
        %690 = vmatpush1.msra.mxu0 0.0
        %691 = vmatprep.subr.mxu0 0.0
        %692 = vmatpush1.msra.mxu0 0.0
        %693 = vmatprep.subr.mxu0 0.0
        %694 = vmatpush1.msra.mxu0 0.0
        %695 = vmatprep.subr.mxu0 0.0
        %696 = vmatpush1.msra.mxu0 0.0
        %697 = vmatprep.subr.mxu0 0.0
        %698 = vmatpush1.msra.mxu0 0.0
        %699 = vmatprep.subr.mxu0 0.0
        %700 = vmatpush1.msra.mxu0 0.0
        %701 = vmatprep.subr.mxu0 0.0
        %702 = vmatpush1.msra.mxu0 0.0
        %703 = vmatprep.subr.mxu0 0.0
        %704 = vmatpush1.msra.mxu0 0.0
        %705 = vmatprep.subr.mxu0 0.0
        %706 = vmatpush1.msra.mxu0 0.0
        %707 = vmatprep.subr.mxu0 0.0
        %708 = vmatpush1.msra.mxu0 0.0
        %709 = vmatprep.subr.mxu0 0.0
        %710 = vmatpush1.msra.mxu0 0.0
        %711 = vmatprep.subr.mxu0 0.0
        %712 = vmatpush1.msra.mxu0 0.0
        %713 = vmatprep.subr.mxu0 0.0
        %714 = vmatpush1.msra.mxu0 0.0
        %715 = vmatprep.subr.mxu0 0.0
        %716 = vmatpush1.msra.mxu0 0.0
        %717 = vmatprep.subr.mxu0 0.0
        %718 = vmatpush1.msra.mxu0 0.0
        %719 = vmatprep.subr.mxu0 0.0
        %720 = vmatpush1.msra.mxu0 0.0
        %721 = vmatprep.subr.mxu0 0.0
        %722 = vmatpush1.msra.mxu0 0.0
        %723 = vmatprep.subr.mxu0 0.0
        %724 = vmatpush1.msra.mxu0 0.0
        %725 = vmatprep.subr.mxu0 0.0
        %726 = vmatpush1.msra.mxu0 0.0
        %727 = vmatprep.subr.mxu0 0.0
        %728 = vmatpush1.msra.mxu0 0.0
        %729 = vmatprep.subr.mxu0 0.0
        %730 = vmatpush1.msra.mxu0 0.0
        %731 = vmatprep.subr.mxu0 0.0
        %732 = vmatpush1.msra.mxu0 0.0
        %733 = vmatprep.subr.mxu0 0.0
        %734 = vmatpush1.msra.mxu0 0.0
        %735 = vmatprep.subr.mxu0 0.0
        %736 = vmatpush1.msra.mxu0 0.0
        %737 = vmatprep.subr.mxu0 0.0
        %738 = vmatpush1.msra.mxu0 0.0
        %739 = vmatprep.subr.mxu0 0.0
        %740 = vmatpush1.msra.mxu0 0.0
        %741 = vmatprep.subr.mxu0 0.0
        %742 = vmatpush1.msra.mxu0 0.0
        %743 = vmatprep.subr.mxu0 0.0
        %744 = vmatpush1.msra.mxu0 0.0
        %745 = vmatprep.subr.mxu0 0.0
        %746 = vmatpush1.msra.mxu0 0.0
        %747 = vmatprep.subr.mxu0 0.0
        %748 = vmatpush1.msra.mxu0 0.0
        %749 = vmatprep.mubr.f32.mxu0 0.0
        %750 = vmatmul.mubr.f32.gmra.mrb[0].mxu0 %v679
        %v751 = vpop.f32.mrb[0].mxu0
        %v752 = vadd.f32 0.0, %v751
        %v753 = vpop.f32.mrb[0].mxu0
        %v754 = vadd.f32 0.0, %v753
        %755 = vdwg.mxu0
        %v756 = vadd.f32 %v674, %v752
        %v757 = vadd.f32 %v675, %v754
        %758 = vrot.lane.b32.xlu0 %v250, 127
        %v759 = vpop.permute.xlu0 %758
        %760 = vrot.lane.b32.xlu0 %v252, 127
        %v761 = vpop.permute.xlu0 %760
        %vm762 = vcmp.lt.s32.totalorder %v259, 127
        %v763 = vsel %vm762, %v759, %v761
        %v764 = vsel %vm762, %v761, %v759
        %s765 = scalar_lea.vmem %s5, 10
        %v766 = vld [vmem:[%s765] sm:$0x3]
        %v768 = vlaneseq
        %v769 = vshrl.u32 %v768, 7
        %v770 = vsub.s32 0, %v769
        %v771 = vrot.slane %v766, %v770
        %v772 = vlaneseq
        %v773 = vshrl.u32 %v772, 7
        %v774 = vsub.s32 1, %v773
        %v775 = vrot.slane %v766, %v774
        %v778 = vmul.f32 %v763, %v771
        %v779 = vmul.f32 %v764, %v775
        %s780 = scalar_lea.vmem %s1, 20
        %v781 = vld [vmem:[%s780] sm:$0xf]
        %v783 = vsel %vm302, %v781, 0
        %v786 = vsel %vm306, %v778, 0
        %v789 = vsel %vm306, %v779, 0
        %791 = vmatprep.subr.mxu0 %v789
        %792 = vmatpush1.msra.mxu0 %v786
        %793 = vmatprep.subr.mxu0 0.0
        %794 = vmatpush1.msra.mxu0 0.0
        %795 = vmatprep.subr.mxu0 0.0
        %796 = vmatpush1.msra.mxu0 0.0
        %797 = vmatprep.subr.mxu0 0.0
        %798 = vmatpush1.msra.mxu0 0.0
        %799 = vmatprep.subr.mxu0 0.0
        %800 = vmatpush1.msra.mxu0 0.0
        %801 = vmatprep.subr.mxu0 0.0
        %802 = vmatpush1.msra.mxu0 0.0
        %803 = vmatprep.subr.mxu0 0.0
        %804 = vmatpush1.msra.mxu0 0.0
        %805 = vmatprep.subr.mxu0 0.0
        %806 = vmatpush1.msra.mxu0 0.0
        %807 = vmatprep.subr.mxu0 0.0
        %808 = vmatpush1.msra.mxu0 0.0
        %809 = vmatprep.subr.mxu0 0.0
        %810 = vmatpush1.msra.mxu0 0.0
        %811 = vmatprep.subr.mxu0 0.0
        %812 = vmatpush1.msra.mxu0 0.0
        %813 = vmatprep.subr.mxu0 0.0
        %814 = vmatpush1.msra.mxu0 0.0
        %815 = vmatprep.subr.mxu0 0.0
        %816 = vmatpush1.msra.mxu0 0.0
        %817 = vmatprep.subr.mxu0 0.0
        %818 = vmatpush1.msra.mxu0 0.0
        %819 = vmatprep.subr.mxu0 0.0
        %820 = vmatpush1.msra.mxu0 0.0
        %821 = vmatprep.subr.mxu0 0.0
        %822 = vmatpush1.msra.mxu0 0.0
        %823 = vmatprep.subr.mxu0 0.0
        %824 = vmatpush1.msra.mxu0 0.0
        %825 = vmatprep.subr.mxu0 0.0
        %826 = vmatpush1.msra.mxu0 0.0
        %827 = vmatprep.subr.mxu0 0.0
        %828 = vmatpush1.msra.mxu0 0.0
        %829 = vmatprep.subr.mxu0 0.0
        %830 = vmatpush1.msra.mxu0 0.0
        %831 = vmatprep.subr.mxu0 0.0
        %832 = vmatpush1.msra.mxu0 0.0
        %833 = vmatprep.subr.mxu0 0.0
        %834 = vmatpush1.msra.mxu0 0.0
        %835 = vmatprep.subr.mxu0 0.0
        %836 = vmatpush1.msra.mxu0 0.0
        %837 = vmatprep.subr.mxu0 0.0
        %838 = vmatpush1.msra.mxu0 0.0
        %839 = vmatprep.subr.mxu0 0.0
        %840 = vmatpush1.msra.mxu0 0.0
        %841 = vmatprep.subr.mxu0 0.0
        %842 = vmatpush1.msra.mxu0 0.0
        %843 = vmatprep.subr.mxu0 0.0
        %844 = vmatpush1.msra.mxu0 0.0
        %845 = vmatprep.subr.mxu0 0.0
        %846 = vmatpush1.msra.mxu0 0.0
        %847 = vmatprep.subr.mxu0 0.0
        %848 = vmatpush1.msra.mxu0 0.0
        %849 = vmatprep.subr.mxu0 0.0
        %850 = vmatpush1.msra.mxu0 0.0
        %851 = vmatprep.subr.mxu0 0.0
        %852 = vmatpush1.msra.mxu0 0.0
        %853 = vmatprep.subr.mxu0 0.0
        %854 = vmatpush1.msra.mxu0 0.0
        %855 = vmatprep.mubr.f32.mxu0 0.0
        %856 = vmatmul.mubr.f32.gmra.mrb[0].mxu0 %v783
        %v857 = vpop.f32.mrb[0].mxu0
        %v858 = vadd.f32 0.0, %v857
        %v859 = vpop.f32.mrb[0].mxu0
        %v860 = vadd.f32 0.0, %v859
        %861 = vdwg.mxu0
        %v862 = vadd.f32 %v756, %v858
        %v863 = vadd.f32 %v757, %v860
        %864 = vrot.lane.b32.xlu0 %v250, 113
        %v865 = vpop.permute.xlu0 %864
        %866 = vrot.lane.b32.xlu0 %v252, 113
        %v867 = vpop.permute.xlu0 %866
        %vm868 = vcmp.lt.s32.totalorder %v259, 113
        %v869 = vsel %vm868, %v865, %v867
        %v870 = vsel %vm868, %v867, %v865
        %s871 = scalar_lea.vmem %s5, 12
        %v872 = vld [vmem:[%s871] sm:$0x3]
        %v874 = vlaneseq
        %v875 = vshrl.u32 %v874, 7
        %v876 = vsub.s32 0, %v875
        %v877 = vrot.slane %v872, %v876
        %v878 = vlaneseq
        %v879 = vshrl.u32 %v878, 7
        %v880 = vsub.s32 1, %v879
        %v881 = vrot.slane %v872, %v880
        %v884 = vmul.f32 %v869, %v877
        %v885 = vmul.f32 %v870, %v881
        %s886 = scalar_lea.vmem %s1, 24
        %v887 = vld [vmem:[%s886] sm:$0xf]
        %v889 = vsel %vm302, %v887, 0
        %v892 = vsel %vm306, %v884, 0
        %v895 = vsel %vm306, %v885, 0
        %897 = vmatprep.subr.mxu0 %v895
        %898 = vmatpush1.msra.mxu0 %v892
        %899 = vmatprep.subr.mxu0 0.0
        %900 = vmatpush1.msra.mxu0 0.0
        %901 = vmatprep.subr.mxu0 0.0
        %902 = vmatpush1.msra.mxu0 0.0
        %903 = vmatprep.subr.mxu0 0.0
        %904 = vmatpush1.msra.mxu0 0.0
        %905 = vmatprep.subr.mxu0 0.0
        %906 = vmatpush1.msra.mxu0 0.0
        %907 = vmatprep.subr.mxu0 0.0
        %908 = vmatpush1.msra.mxu0 0.0
        %909 = vmatprep.subr.mxu0 0.0
        %910 = vmatpush1.msra.mxu0 0.0
        %911 = vmatprep.subr.mxu0 0.0
        %912 = vmatpush1.msra.mxu0 0.0
        %913 = vmatprep.subr.mxu0 0.0
        %914 = vmatpush1.msra.mxu0 0.0
        %915 = vmatprep.subr.mxu0 0.0
        %916 = vmatpush1.msra.mxu0 0.0
        %917 = vmatprep.subr.mxu0 0.0
        %918 = vmatpush1.msra.mxu0 0.0
        %919 = vmatprep.subr.mxu0 0.0
        %920 = vmatpush1.msra.mxu0 0.0
        %921 = vmatprep.subr.mxu0 0.0
        %922 = vmatpush1.msra.mxu0 0.0
        %923 = vmatprep.subr.mxu0 0.0
        %924 = vmatpush1.msra.mxu0 0.0
        %925 = vmatprep.subr.mxu0 0.0
        %926 = vmatpush1.msra.mxu0 0.0
        %927 = vmatprep.subr.mxu0 0.0
        %928 = vmatpush1.msra.mxu0 0.0
        %929 = vmatprep.subr.mxu0 0.0
        %930 = vmatpush1.msra.mxu0 0.0
        %931 = vmatprep.subr.mxu0 0.0
        %932 = vmatpush1.msra.mxu0 0.0
        %933 = vmatprep.subr.mxu0 0.0
        %934 = vmatpush1.msra.mxu0 0.0
        %935 = vmatprep.subr.mxu0 0.0
        %936 = vmatpush1.msra.mxu0 0.0
        %937 = vmatprep.subr.mxu0 0.0
        %938 = vmatpush1.msra.mxu0 0.0
        %939 = vmatprep.subr.mxu0 0.0
        %940 = vmatpush1.msra.mxu0 0.0
        %941 = vmatprep.subr.mxu0 0.0
        %942 = vmatpush1.msra.mxu0 0.0
        %943 = vmatprep.subr.mxu0 0.0
        %944 = vmatpush1.msra.mxu0 0.0
        %945 = vmatprep.subr.mxu0 0.0
        %946 = vmatpush1.msra.mxu0 0.0
        %947 = vmatprep.subr.mxu0 0.0
        %948 = vmatpush1.msra.mxu0 0.0
        %949 = vmatprep.subr.mxu0 0.0
        %950 = vmatpush1.msra.mxu0 0.0
        %951 = vmatprep.subr.mxu0 0.0
        %952 = vmatpush1.msra.mxu0 0.0
        %953 = vmatprep.subr.mxu0 0.0
        %954 = vmatpush1.msra.mxu0 0.0
        %955 = vmatprep.subr.mxu0 0.0
        %956 = vmatpush1.msra.mxu0 0.0
        %957 = vmatprep.subr.mxu0 0.0
        %958 = vmatpush1.msra.mxu0 0.0
        %959 = vmatprep.subr.mxu0 0.0
        %960 = vmatpush1.msra.mxu0 0.0
        %961 = vmatprep.mubr.f32.mxu0 0.0
        %962 = vmatmul.mubr.f32.gmra.mrb[0].mxu0 %v889
        %v963 = vpop.f32.mrb[0].mxu0
        %v964 = vadd.f32 0.0, %v963
        %v965 = vpop.f32.mrb[0].mxu0
        %v966 = vadd.f32 0.0, %v965
        %967 = vdwg.mxu0
        %v968 = vadd.f32 %v862, %v964
        %v969 = vadd.f32 %v863, %v966
        %970 = vrot.lane.b32.xlu0 %v250, 112
        %v971 = vpop.permute.xlu0 %970
        %972 = vrot.lane.b32.xlu0 %v252, 112
        %v973 = vpop.permute.xlu0 %972
        %vm974 = vcmp.lt.s32.totalorder %v259, 112
        %v975 = vsel %vm974, %v971, %v973
        %v976 = vsel %vm974, %v973, %v971
        %s977 = scalar_lea.vmem %s5, 14
        %v978 = vld [vmem:[%s977] sm:$0x3]
        %v980 = vlaneseq
        %v981 = vshrl.u32 %v980, 7
        %v982 = vsub.s32 0, %v981
        %v983 = vrot.slane %v978, %v982
        %v984 = vlaneseq
        %v985 = vshrl.u32 %v984, 7
        %v986 = vsub.s32 1, %v985
        %v987 = vrot.slane %v978, %v986
        %v990 = vmul.f32 %v975, %v983
        %v991 = vmul.f32 %v976, %v987
        %s992 = scalar_lea.vmem %s1, 28
        %v993 = vld [vmem:[%s992] sm:$0xf]
        %v995 = vsel %vm302, %v993, 0
        %v998 = vsel %vm306, %v990, 0
        %v1001 = vsel %vm306, %v991, 0
        %1003 = vmatprep.subr.mxu0 %v1001
        %1004 = vmatpush1.msra.mxu0 %v998
        %1005 = vmatprep.subr.mxu0 0.0
        %1006 = vmatpush1.msra.mxu0 0.0
        %1007 = vmatprep.subr.mxu0 0.0
        %1008 = vmatpush1.msra.mxu0 0.0
        %1009 = vmatprep.subr.mxu0 0.0
        %1010 = vmatpush1.msra.mxu0 0.0
        %1011 = vmatprep.subr.mxu0 0.0
        %1012 = vmatpush1.msra.mxu0 0.0
        %1013 = vmatprep.subr.mxu0 0.0
        %1014 = vmatpush1.msra.mxu0 0.0
        %1015 = vmatprep.subr.mxu0 0.0
        %1016 = vmatpush1.msra.mxu0 0.0
        %1017 = vmatprep.subr.mxu0 0.0
        %1018 = vmatpush1.msra.mxu0 0.0
        %1019 = vmatprep.subr.mxu0 0.0
        %1020 = vmatpush1.msra.mxu0 0.0
        %1021 = vmatprep.subr.mxu0 0.0
        %1022 = vmatpush1.msra.mxu0 0.0
        %1023 = vmatprep.subr.mxu0 0.0
        %1024 = vmatpush1.msra.mxu0 0.0
        %1025 = vmatprep.subr.mxu0 0.0
        %1026 = vmatpush1.msra.mxu0 0.0
        %1027 = vmatprep.subr.mxu0 0.0
        %1028 = vmatpush1.msra.mxu0 0.0
        %1029 = vmatprep.subr.mxu0 0.0
        %1030 = vmatpush1.msra.mxu0 0.0
        %1031 = vmatprep.subr.mxu0 0.0
        %1032 = vmatpush1.msra.mxu0 0.0
        %1033 = vmatprep.subr.mxu0 0.0
        %1034 = vmatpush1.msra.mxu0 0.0
        %1035 = vmatprep.subr.mxu0 0.0
        %1036 = vmatpush1.msra.mxu0 0.0
        %1037 = vmatprep.subr.mxu0 0.0
        %1038 = vmatpush1.msra.mxu0 0.0
        %1039 = vmatprep.subr.mxu0 0.0
        %1040 = vmatpush1.msra.mxu0 0.0
        %1041 = vmatprep.subr.mxu0 0.0
        %1042 = vmatpush1.msra.mxu0 0.0
        %1043 = vmatprep.subr.mxu0 0.0
        %1044 = vmatpush1.msra.mxu0 0.0
        %1045 = vmatprep.subr.mxu0 0.0
        %1046 = vmatpush1.msra.mxu0 0.0
        %1047 = vmatprep.subr.mxu0 0.0
        %1048 = vmatpush1.msra.mxu0 0.0
        %1049 = vmatprep.subr.mxu0 0.0
        %1050 = vmatpush1.msra.mxu0 0.0
        %1051 = vmatprep.subr.mxu0 0.0
        %1052 = vmatpush1.msra.mxu0 0.0
        %1053 = vmatprep.subr.mxu0 0.0
        %1054 = vmatpush1.msra.mxu0 0.0
        %1055 = vmatprep.subr.mxu0 0.0
        %1056 = vmatpush1.msra.mxu0 0.0
        %1057 = vmatprep.subr.mxu0 0.0
        %1058 = vmatpush1.msra.mxu0 0.0
        %1059 = vmatprep.subr.mxu0 0.0
        %1060 = vmatpush1.msra.mxu0 0.0
        %1061 = vmatprep.subr.mxu0 0.0
        %1062 = vmatpush1.msra.mxu0 0.0
        %1063 = vmatprep.subr.mxu0 0.0
        %1064 = vmatpush1.msra.mxu0 0.0
        %1065 = vmatprep.subr.mxu0 0.0
        %1066 = vmatpush1.msra.mxu0 0.0
        %1067 = vmatprep.mubr.f32.mxu0 0.0
        %1068 = vmatmul.mubr.f32.gmra.mrb[0].mxu0 %v995
        %v1069 = vpop.f32.mrb[0].mxu0
        %v1070 = vadd.f32 0.0, %v1069
        %v1071 = vpop.f32.mrb[0].mxu0
        %v1072 = vadd.f32 0.0, %v1071
        %1073 = vdwg.mxu0
        %v1074 = vadd.f32 %v968, %v1070
        %v1075 = vadd.f32 %v969, %v1072
        %1076 = vrot.lane.b32.xlu0 %v250, 111
        %v1077 = vpop.permute.xlu0 %1076
        %1078 = vrot.lane.b32.xlu0 %v252, 111
        %v1079 = vpop.permute.xlu0 %1078
        %vm1080 = vcmp.lt.s32.totalorder %v259, 111
        %v1081 = vsel %vm1080, %v1077, %v1079
        %v1082 = vsel %vm1080, %v1079, %v1077
        %s1083 = scalar_lea.vmem %s5, 16
        %v1084 = vld [vmem:[%s1083] sm:$0x3]
        %v1086 = vlaneseq
        %v1087 = vshrl.u32 %v1086, 7
        %v1088 = vsub.s32 0, %v1087
        %v1089 = vrot.slane %v1084, %v1088
        %v1090 = vlaneseq
        %v1091 = vshrl.u32 %v1090, 7
        %v1092 = vsub.s32 1, %v1091
        %v1093 = vrot.slane %v1084, %v1092
        %v1096 = vmul.f32 %v1081, %v1089
        %v1097 = vmul.f32 %v1082, %v1093
        %s1098 = scalar_lea.vmem %s1, 32
        %v1099 = vld [vmem:[%s1098] sm:$0xf]
        %v1101 = vsel %vm302, %v1099, 0
        %v1104 = vsel %vm306, %v1096, 0
        %v1107 = vsel %vm306, %v1097, 0
        %1109 = vmatprep.subr.mxu0 %v1107
        %1110 = vmatpush1.msra.mxu0 %v1104
        %1111 = vmatprep.subr.mxu0 0.0
        %1112 = vmatpush1.msra.mxu0 0.0
        %1113 = vmatprep.subr.mxu0 0.0
        %1114 = vmatpush1.msra.mxu0 0.0
        %1115 = vmatprep.subr.mxu0 0.0
        %1116 = vmatpush1.msra.mxu0 0.0
        %1117 = vmatprep.subr.mxu0 0.0
        %1118 = vmatpush1.msra.mxu0 0.0
        %1119 = vmatprep.subr.mxu0 0.0
        %1120 = vmatpush1.msra.mxu0 0.0
        %1121 = vmatprep.subr.mxu0 0.0
        %1122 = vmatpush1.msra.mxu0 0.0
        %1123 = vmatprep.subr.mxu0 0.0
        %1124 = vmatpush1.msra.mxu0 0.0
        %1125 = vmatprep.subr.mxu0 0.0
        %1126 = vmatpush1.msra.mxu0 0.0
        %1127 = vmatprep.subr.mxu0 0.0
        %1128 = vmatpush1.msra.mxu0 0.0
        %1129 = vmatprep.subr.mxu0 0.0
        %1130 = vmatpush1.msra.mxu0 0.0
        %1131 = vmatprep.subr.mxu0 0.0
        %1132 = vmatpush1.msra.mxu0 0.0
        %1133 = vmatprep.subr.mxu0 0.0
        %1134 = vmatpush1.msra.mxu0 0.0
        %1135 = vmatprep.subr.mxu0 0.0
        %1136 = vmatpush1.msra.mxu0 0.0
        %1137 = vmatprep.subr.mxu0 0.0
        %1138 = vmatpush1.msra.mxu0 0.0
        %1139 = vmatprep.subr.mxu0 0.0
        %1140 = vmatpush1.msra.mxu0 0.0
        %1141 = vmatprep.subr.mxu0 0.0
        %1142 = vmatpush1.msra.mxu0 0.0
        %1143 = vmatprep.subr.mxu0 0.0
        %1144 = vmatpush1.msra.mxu0 0.0
        %1145 = vmatprep.subr.mxu0 0.0
        %1146 = vmatpush1.msra.mxu0 0.0
        %1147 = vmatprep.subr.mxu0 0.0
        %1148 = vmatpush1.msra.mxu0 0.0
        %1149 = vmatprep.subr.mxu0 0.0
        %1150 = vmatpush1.msra.mxu0 0.0
        %1151 = vmatprep.subr.mxu0 0.0
        %1152 = vmatpush1.msra.mxu0 0.0
        %1153 = vmatprep.subr.mxu0 0.0
        %1154 = vmatpush1.msra.mxu0 0.0
        %1155 = vmatprep.subr.mxu0 0.0
        %1156 = vmatpush1.msra.mxu0 0.0
        %1157 = vmatprep.subr.mxu0 0.0
        %1158 = vmatpush1.msra.mxu0 0.0
        %1159 = vmatprep.subr.mxu0 0.0
        %1160 = vmatpush1.msra.mxu0 0.0
        %1161 = vmatprep.subr.mxu0 0.0
        %1162 = vmatpush1.msra.mxu0 0.0
        %1163 = vmatprep.subr.mxu0 0.0
        %1164 = vmatpush1.msra.mxu0 0.0
        %1165 = vmatprep.subr.mxu0 0.0
        %1166 = vmatpush1.msra.mxu0 0.0
        %1167 = vmatprep.subr.mxu0 0.0
        %1168 = vmatpush1.msra.mxu0 0.0
        %1169 = vmatprep.subr.mxu0 0.0
        %1170 = vmatpush1.msra.mxu0 0.0
        %1171 = vmatprep.subr.mxu0 0.0
        %1172 = vmatpush1.msra.mxu0 0.0
        %1173 = vmatprep.mubr.f32.mxu0 0.0
        %1174 = vmatmul.mubr.f32.gmra.mrb[0].mxu0 %v1101
        %v1175 = vpop.f32.mrb[0].mxu0
        %v1176 = vadd.f32 0.0, %v1175
        %v1177 = vpop.f32.mrb[0].mxu0
        %v1178 = vadd.f32 0.0, %v1177
        %1179 = vdwg.mxu0
        %v1180 = vadd.f32 %v1074, %v1176
        %v1181 = vadd.f32 %v1075, %v1178
        %v1182 = vld [vmem:[%s2] sm:$0xf]
        %1184 = vset.pattern.permute.xlu0 0
        %1185 = vperm.xlu0 %1184, %v1182
        %v1186 = vpop.permute.xlu0 %1185
        %v1188 = vadd.f32 %v1180, %v1186
        %v1189 = vadd.f32 %v1181, %v1186
        %v1190 = vmax.f32 %v1188, 0.0
        %v1191 = vmax.f32 %v1189, 0.0
        %1192 = vrot.lane.b32.xlu0 %v1190, 17
        %v1193 = vpop.permute.xlu0 %1192
        %1194 = vrot.lane.b32.xlu0 %v1191, 17
        %v1195 = vpop.permute.xlu0 %1194
        %v1196 = vsel %vm260, %v1193, %v1195
        %v1197 = vsel %vm260, %v1195, %v1193
        %v1198 = vmul.f32 %v1197, %v268
        %v1199 = vmul.f32 %v1196, %v272
        %v1200 = vld [vmem:[%s3] sm:$0xf]
        %1201 = vrot.lane.b32.xlu0 %v1190, 16
        %v1202 = vpop.permute.xlu0 %1201
        %1203 = vrot.lane.b32.xlu0 %v1191, 16
        %v1204 = vpop.permute.xlu0 %1203
        %v1205 = vsel %vm282, %v1202, %v1204
        %v1206 = vsel %vm282, %v1204, %v1202
        %v1207 = vmul.f32 %v1206, %v291
        %v1208 = vmul.f32 %v1205, %v295
        %s1209 = scalar_lea.vmem %s3, 4
        %v1210 = vld [vmem:[%s1209] sm:$0xf]
        %v1212 = vsel %vm302, %v1210, 0
        %v1215 = vsel %vm306, %v1207, 0
        %v1218 = vsel %vm306, %v1208, 0
        %1220 = vmatprep.subr.mxu0 %v1218
        %1221 = vmatpush1.msra.mxu0 %v1215
        %1222 = vmatprep.subr.mxu0 0.0
        %1223 = vmatpush1.msra.mxu0 0.0
        %1224 = vmatprep.subr.mxu0 0.0
        %1225 = vmatpush1.msra.mxu0 0.0
        %1226 = vmatprep.subr.mxu0 0.0
        %1227 = vmatpush1.msra.mxu0 0.0
        %1228 = vmatprep.subr.mxu0 0.0
        %1229 = vmatpush1.msra.mxu0 0.0
        %1230 = vmatprep.subr.mxu0 0.0
        %1231 = vmatpush1.msra.mxu0 0.0
        %1232 = vmatprep.subr.mxu0 0.0
        %1233 = vmatpush1.msra.mxu0 0.0
        %1234 = vmatprep.subr.mxu0 0.0
        %1235 = vmatpush1.msra.mxu0 0.0
        %1236 = vmatprep.subr.mxu0 0.0
        %1237 = vmatpush1.msra.mxu0 0.0
        %1238 = vmatprep.subr.mxu0 0.0
        %1239 = vmatpush1.msra.mxu0 0.0
        %1240 = vmatprep.subr.mxu0 0.0
        %1241 = vmatpush1.msra.mxu0 0.0
        %1242 = vmatprep.subr.mxu0 0.0
        %1243 = vmatpush1.msra.mxu0 0.0
        %1244 = vmatprep.subr.mxu0 0.0
        %1245 = vmatpush1.msra.mxu0 0.0
        %1246 = vmatprep.subr.mxu0 0.0
        %1247 = vmatpush1.msra.mxu0 0.0
        %1248 = vmatprep.subr.mxu0 0.0
        %1249 = vmatpush1.msra.mxu0 0.0
        %1250 = vmatprep.subr.mxu0 0.0
        %1251 = vmatpush1.msra.mxu0 0.0
        %1252 = vmatprep.subr.mxu0 0.0
        %1253 = vmatpush1.msra.mxu0 0.0
        %1254 = vmatprep.subr.mxu0 0.0
        %1255 = vmatpush1.msra.mxu0 0.0
        %1256 = vmatprep.subr.mxu0 0.0
        %1257 = vmatpush1.msra.mxu0 0.0
        %1258 = vmatprep.subr.mxu0 0.0
        %1259 = vmatpush1.msra.mxu0 0.0
        %1260 = vmatprep.subr.mxu0 0.0
        %1261 = vmatpush1.msra.mxu0 0.0
        %1262 = vmatprep.subr.mxu0 0.0
        %1263 = vmatpush1.msra.mxu0 0.0
        %1264 = vmatprep.subr.mxu0 0.0
        %1265 = vmatpush1.msra.mxu0 0.0
        %1266 = vmatprep.subr.mxu0 0.0
        %1267 = vmatpush1.msra.mxu0 0.0
        %1268 = vmatprep.subr.mxu0 0.0
        %1269 = vmatpush1.msra.mxu0 0.0
        %1270 = vmatprep.subr.mxu0 0.0
        %1271 = vmatpush1.msra.mxu0 0.0
        %1272 = vmatprep.subr.mxu0 0.0
        %1273 = vmatpush1.msra.mxu0 0.0
        %1274 = vmatprep.subr.mxu0 0.0
        %1275 = vmatpush1.msra.mxu0 0.0
        %1276 = vmatprep.subr.mxu0 0.0
        %1277 = vmatpush1.msra.mxu0 0.0
        %1278 = vmatprep.subr.mxu0 0.0
        %1279 = vmatpush1.msra.mxu0 0.0
        %1280 = vmatprep.subr.mxu0 0.0
        %1281 = vmatpush1.msra.mxu0 0.0
        %1282 = vmatprep.subr.mxu0 0.0
        %1283 = vmatpush1.msra.mxu0 0.0
        %1284 = vmatprep.mubr.f32.mxu0 0.0
        %1285 = vmatmul.mubr.f32.gmra.mrb[0].mxu0 %v1212
        %v1286 = vpop.f32.mrb[0].mxu0
        %v1287 = vadd.f32 0.0, %v1286
        %v1288 = vpop.f32.mrb[0].mxu0
        %v1289 = vadd.f32 0.0, %v1288
        %1290 = vdwg.mxu0
        %v1292 = vsel %vm302, %v1200, 0
        %v1295 = vsel %vm306, %v1198, 0
        %v1298 = vsel %vm306, %v1199, 0
        %1300 = vmatprep.subr.mxu0 %v1298
        %1301 = vmatpush1.msra.mxu0 %v1295
        %1302 = vmatprep.subr.mxu0 0.0
        %1303 = vmatpush1.msra.mxu0 0.0
        %1304 = vmatprep.subr.mxu0 0.0
        %1305 = vmatpush1.msra.mxu0 0.0
        %1306 = vmatprep.subr.mxu0 0.0
        %1307 = vmatpush1.msra.mxu0 0.0
        %1308 = vmatprep.subr.mxu0 0.0
        %1309 = vmatpush1.msra.mxu0 0.0
        %1310 = vmatprep.subr.mxu0 0.0
        %1311 = vmatpush1.msra.mxu0 0.0
        %1312 = vmatprep.subr.mxu0 0.0
        %1313 = vmatpush1.msra.mxu0 0.0
        %1314 = vmatprep.subr.mxu0 0.0
        %1315 = vmatpush1.msra.mxu0 0.0
        %1316 = vmatprep.subr.mxu0 0.0
        %1317 = vmatpush1.msra.mxu0 0.0
        %1318 = vmatprep.subr.mxu0 0.0
        %1319 = vmatpush1.msra.mxu0 0.0
        %1320 = vmatprep.subr.mxu0 0.0
        %1321 = vmatpush1.msra.mxu0 0.0
        %1322 = vmatprep.subr.mxu0 0.0
        %1323 = vmatpush1.msra.mxu0 0.0
        %1324 = vmatprep.subr.mxu0 0.0
        %1325 = vmatpush1.msra.mxu0 0.0
        %1326 = vmatprep.subr.mxu0 0.0
        %1327 = vmatpush1.msra.mxu0 0.0
        %1328 = vmatprep.subr.mxu0 0.0
        %1329 = vmatpush1.msra.mxu0 0.0
        %1330 = vmatprep.subr.mxu0 0.0
        %1331 = vmatpush1.msra.mxu0 0.0
        %1332 = vmatprep.subr.mxu0 0.0
        %1333 = vmatpush1.msra.mxu0 0.0
        %1334 = vmatprep.subr.mxu0 0.0
        %1335 = vmatpush1.msra.mxu0 0.0
        %1336 = vmatprep.subr.mxu0 0.0
        %1337 = vmatpush1.msra.mxu0 0.0
        %1338 = vmatprep.subr.mxu0 0.0
        %1339 = vmatpush1.msra.mxu0 0.0
        %1340 = vmatprep.subr.mxu0 0.0
        %1341 = vmatpush1.msra.mxu0 0.0
        %1342 = vmatprep.subr.mxu0 0.0
        %1343 = vmatpush1.msra.mxu0 0.0
        %1344 = vmatprep.subr.mxu0 0.0
        %1345 = vmatpush1.msra.mxu0 0.0
        %1346 = vmatprep.subr.mxu0 0.0
        %1347 = vmatpush1.msra.mxu0 0.0
        %1348 = vmatprep.subr.mxu0 0.0
        %1349 = vmatpush1.msra.mxu0 0.0
        %1350 = vmatprep.subr.mxu0 0.0
        %1351 = vmatpush1.msra.mxu0 0.0
        %1352 = vmatprep.subr.mxu0 0.0
        %1353 = vmatpush1.msra.mxu0 0.0
        %1354 = vmatprep.subr.mxu0 0.0
        %1355 = vmatpush1.msra.mxu0 0.0
        %1356 = vmatprep.subr.mxu0 0.0
        %1357 = vmatpush1.msra.mxu0 0.0
        %1358 = vmatprep.subr.mxu0 0.0
        %1359 = vmatpush1.msra.mxu0 0.0
        %1360 = vmatprep.subr.mxu0 0.0
        %1361 = vmatpush1.msra.mxu0 0.0
        %1362 = vmatprep.subr.mxu0 0.0
        %1363 = vmatpush1.msra.mxu0 0.0
        %1364 = vmatprep.mubr.f32.mxu0 0.0
        %1365 = vmatmul.mubr.f32.gmra.mrb[0].mxu0 %v1292
        %v1366 = vpop.f32.mrb[0].mxu0
        %v1367 = vadd.f32 %v1287, %v1366
        %v1368 = vpop.f32.mrb[0].mxu0
        %v1369 = vadd.f32 %v1289, %v1368
        %1370 = vdwg.mxu0
        %1371 = vrot.lane.b32.xlu0 %v1190, 15
        %v1372 = vpop.permute.xlu0 %1371
        %1373 = vrot.lane.b32.xlu0 %v1191, 15
        %v1374 = vpop.permute.xlu0 %1373
        %v1375 = vsel %vm468, %v1372, %v1374
        %v1376 = vsel %vm468, %v1374, %v1372
        %v1377 = vmul.f32 %v1376, %v477
        %v1378 = vmul.f32 %v1375, %v481
        %s1379 = scalar_lea.vmem %s3, 8
        %v1380 = vld [vmem:[%s1379] sm:$0xf]
        %v1382 = vsel %vm302, %v1380, 0
        %v1385 = vsel %vm306, %v1377, 0
        %v1388 = vsel %vm306, %v1378, 0
        %1390 = vmatprep.subr.mxu0 %v1388
        %1391 = vmatpush1.msra.mxu0 %v1385
        %1392 = vmatprep.subr.mxu0 0.0
        %1393 = vmatpush1.msra.mxu0 0.0
        %1394 = vmatprep.subr.mxu0 0.0
        %1395 = vmatpush1.msra.mxu0 0.0
        %1396 = vmatprep.subr.mxu0 0.0
        %1397 = vmatpush1.msra.mxu0 0.0
        %1398 = vmatprep.subr.mxu0 0.0
        %1399 = vmatpush1.msra.mxu0 0.0
        %1400 = vmatprep.subr.mxu0 0.0
        %1401 = vmatpush1.msra.mxu0 0.0
        %1402 = vmatprep.subr.mxu0 0.0
        %1403 = vmatpush1.msra.mxu0 0.0
        %1404 = vmatprep.subr.mxu0 0.0
        %1405 = vmatpush1.msra.mxu0 0.0
        %1406 = vmatprep.subr.mxu0 0.0
        %1407 = vmatpush1.msra.mxu0 0.0
        %1408 = vmatprep.subr.mxu0 0.0
        %1409 = vmatpush1.msra.mxu0 0.0
        %1410 = vmatprep.subr.mxu0 0.0
        %1411 = vmatpush1.msra.mxu0 0.0
        %1412 = vmatprep.subr.mxu0 0.0
        %1413 = vmatpush1.msra.mxu0 0.0
        %1414 = vmatprep.subr.mxu0 0.0
        %1415 = vmatpush1.msra.mxu0 0.0
        %1416 = vmatprep.subr.mxu0 0.0
        %1417 = vmatpush1.msra.mxu0 0.0
        %1418 = vmatprep.subr.mxu0 0.0
        %1419 = vmatpush1.msra.mxu0 0.0
        %1420 = vmatprep.subr.mxu0 0.0
        %1421 = vmatpush1.msra.mxu0 0.0
        %1422 = vmatprep.subr.mxu0 0.0
        %1423 = vmatpush1.msra.mxu0 0.0
        %1424 = vmatprep.subr.mxu0 0.0
        %1425 = vmatpush1.msra.mxu0 0.0
        %1426 = vmatprep.subr.mxu0 0.0
        %1427 = vmatpush1.msra.mxu0 0.0
        %1428 = vmatprep.subr.mxu0 0.0
        %1429 = vmatpush1.msra.mxu0 0.0
        %1430 = vmatprep.subr.mxu0 0.0
        %1431 = vmatpush1.msra.mxu0 0.0
        %1432 = vmatprep.subr.mxu0 0.0
        %1433 = vmatpush1.msra.mxu0 0.0
        %1434 = vmatprep.subr.mxu0 0.0
        %1435 = vmatpush1.msra.mxu0 0.0
        %1436 = vmatprep.subr.mxu0 0.0
        %1437 = vmatpush1.msra.mxu0 0.0
        %1438 = vmatprep.subr.mxu0 0.0
        %1439 = vmatpush1.msra.mxu0 0.0
        %1440 = vmatprep.subr.mxu0 0.0
        %1441 = vmatpush1.msra.mxu0 0.0
        %1442 = vmatprep.subr.mxu0 0.0
        %1443 = vmatpush1.msra.mxu0 0.0
        %1444 = vmatprep.subr.mxu0 0.0
        %1445 = vmatpush1.msra.mxu0 0.0
        %1446 = vmatprep.subr.mxu0 0.0
        %1447 = vmatpush1.msra.mxu0 0.0
        %1448 = vmatprep.subr.mxu0 0.0
        %1449 = vmatpush1.msra.mxu0 0.0
        %1450 = vmatprep.subr.mxu0 0.0
        %1451 = vmatpush1.msra.mxu0 0.0
        %1452 = vmatprep.subr.mxu0 0.0
        %1453 = vmatpush1.msra.mxu0 0.0
        %1454 = vmatprep.mubr.f32.mxu0 0.0
        %1455 = vmatmul.mubr.f32.gmra.mrb[0].mxu0 %v1382
        %v1456 = vpop.f32.mrb[0].mxu0
        %v1457 = vadd.f32 0.0, %v1456
        %v1458 = vpop.f32.mrb[0].mxu0
        %v1459 = vadd.f32 0.0, %v1458
        %1460 = vdwg.mxu0
        %v1461 = vadd.f32 %v1367, %v1457
        %v1462 = vadd.f32 %v1369, %v1459
        %1463 = vrot.lane.b32.xlu0 %v1190, 1
        %v1464 = vpop.permute.xlu0 %1463
        %1465 = vrot.lane.b32.xlu0 %v1191, 1
        %v1466 = vpop.permute.xlu0 %1465
        %v1467 = vsel %vm574, %v1464, %v1466
        %v1468 = vsel %vm574, %v1466, %v1464
        %v1469 = vmul.f32 %v1468, %v583
        %v1470 = vmul.f32 %v1467, %v587
        %s1471 = scalar_lea.vmem %s3, 12
        %v1472 = vld [vmem:[%s1471] sm:$0xf]
        %v1474 = vsel %vm302, %v1472, 0
        %v1477 = vsel %vm306, %v1469, 0
        %v1480 = vsel %vm306, %v1470, 0
        %1482 = vmatprep.subr.mxu0 %v1480
        %1483 = vmatpush1.msra.mxu0 %v1477
        %1484 = vmatprep.subr.mxu0 0.0
        %1485 = vmatpush1.msra.mxu0 0.0
        %1486 = vmatprep.subr.mxu0 0.0
        %1487 = vmatpush1.msra.mxu0 0.0
        %1488 = vmatprep.subr.mxu0 0.0
        %1489 = vmatpush1.msra.mxu0 0.0
        %1490 = vmatprep.subr.mxu0 0.0
        %1491 = vmatpush1.msra.mxu0 0.0
        %1492 = vmatprep.subr.mxu0 0.0
        %1493 = vmatpush1.msra.mxu0 0.0
        %1494 = vmatprep.subr.mxu0 0.0
        %1495 = vmatpush1.msra.mxu0 0.0
        %1496 = vmatprep.subr.mxu0 0.0
        %1497 = vmatpush1.msra.mxu0 0.0
        %1498 = vmatprep.subr.mxu0 0.0
        %1499 = vmatpush1.msra.mxu0 0.0
        %1500 = vmatprep.subr.mxu0 0.0
        %1501 = vmatpush1.msra.mxu0 0.0
        %1502 = vmatprep.subr.mxu0 0.0
        %1503 = vmatpush1.msra.mxu0 0.0
        %1504 = vmatprep.subr.mxu0 0.0
        %1505 = vmatpush1.msra.mxu0 0.0
        %1506 = vmatprep.subr.mxu0 0.0
        %1507 = vmatpush1.msra.mxu0 0.0
        %1508 = vmatprep.subr.mxu0 0.0
        %1509 = vmatpush1.msra.mxu0 0.0
        %1510 = vmatprep.subr.mxu0 0.0
        %1511 = vmatpush1.msra.mxu0 0.0
        %1512 = vmatprep.subr.mxu0 0.0
        %1513 = vmatpush1.msra.mxu0 0.0
        %1514 = vmatprep.subr.mxu0 0.0
        %1515 = vmatpush1.msra.mxu0 0.0
        %1516 = vmatprep.subr.mxu0 0.0
        %1517 = vmatpush1.msra.mxu0 0.0
        %1518 = vmatprep.subr.mxu0 0.0
        %1519 = vmatpush1.msra.mxu0 0.0
        %1520 = vmatprep.subr.mxu0 0.0
        %1521 = vmatpush1.msra.mxu0 0.0
        %1522 = vmatprep.subr.mxu0 0.0
        %1523 = vmatpush1.msra.mxu0 0.0
        %1524 = vmatprep.subr.mxu0 0.0
        %1525 = vmatpush1.msra.mxu0 0.0
        %1526 = vmatprep.subr.mxu0 0.0
        %1527 = vmatpush1.msra.mxu0 0.0
        %1528 = vmatprep.subr.mxu0 0.0
        %1529 = vmatpush1.msra.mxu0 0.0
        %1530 = vmatprep.subr.mxu0 0.0
        %1531 = vmatpush1.msra.mxu0 0.0
        %1532 = vmatprep.subr.mxu0 0.0
        %1533 = vmatpush1.msra.mxu0 0.0
        %1534 = vmatprep.subr.mxu0 0.0
        %1535 = vmatpush1.msra.mxu0 0.0
        %1536 = vmatprep.subr.mxu0 0.0
        %1537 = vmatpush1.msra.mxu0 0.0
        %1538 = vmatprep.subr.mxu0 0.0
        %1539 = vmatpush1.msra.mxu0 0.0
        %1540 = vmatprep.subr.mxu0 0.0
        %1541 = vmatpush1.msra.mxu0 0.0
        %1542 = vmatprep.subr.mxu0 0.0
        %1543 = vmatpush1.msra.mxu0 0.0
        %1544 = vmatprep.subr.mxu0 0.0
        %1545 = vmatpush1.msra.mxu0 0.0
        %1546 = vmatprep.mubr.f32.mxu0 0.0
        %1547 = vmatmul.mubr.f32.gmra.mrb[0].mxu0 %v1474
        %v1548 = vpop.f32.mrb[0].mxu0
        %v1549 = vadd.f32 0.0, %v1548
        %v1550 = vpop.f32.mrb[0].mxu0
        %v1551 = vadd.f32 0.0, %v1550
        %1552 = vdwg.mxu0
        %v1553 = vadd.f32 %v1461, %v1549
        %v1554 = vadd.f32 %v1462, %v1551
        %s1555 = scalar_lea.vmem %s3, 16
        %v1556 = vld [vmem:[%s1555] sm:$0xf]
        %v1558 = vsel %vm302, %v1556, 0
        %v1561 = vsel %vm306, %v1190, 0
        %v1564 = vsel %vm306, %v1191, 0
        %1566 = vmatprep.subr.mxu0 %v1564
        %1567 = vmatpush1.msra.mxu0 %v1561
        %1568 = vmatprep.subr.mxu0 0.0
        %1569 = vmatpush1.msra.mxu0 0.0
        %1570 = vmatprep.subr.mxu0 0.0
        %1571 = vmatpush1.msra.mxu0 0.0
        %1572 = vmatprep.subr.mxu0 0.0
        %1573 = vmatpush1.msra.mxu0 0.0
        %1574 = vmatprep.subr.mxu0 0.0
        %1575 = vmatpush1.msra.mxu0 0.0
        %1576 = vmatprep.subr.mxu0 0.0
        %1577 = vmatpush1.msra.mxu0 0.0
        %1578 = vmatprep.subr.mxu0 0.0
        %1579 = vmatpush1.msra.mxu0 0.0
        %1580 = vmatprep.subr.mxu0 0.0
        %1581 = vmatpush1.msra.mxu0 0.0
        %1582 = vmatprep.subr.mxu0 0.0
        %1583 = vmatpush1.msra.mxu0 0.0
        %1584 = vmatprep.subr.mxu0 0.0
        %1585 = vmatpush1.msra.mxu0 0.0
        %1586 = vmatprep.subr.mxu0 0.0
        %1587 = vmatpush1.msra.mxu0 0.0
        %1588 = vmatprep.subr.mxu0 0.0
        %1589 = vmatpush1.msra.mxu0 0.0
        %1590 = vmatprep.subr.mxu0 0.0
        %1591 = vmatpush1.msra.mxu0 0.0
        %1592 = vmatprep.subr.mxu0 0.0
        %1593 = vmatpush1.msra.mxu0 0.0
        %1594 = vmatprep.subr.mxu0 0.0
        %1595 = vmatpush1.msra.mxu0 0.0
        %1596 = vmatprep.subr.mxu0 0.0
        %1597 = vmatpush1.msra.mxu0 0.0
        %1598 = vmatprep.subr.mxu0 0.0
        %1599 = vmatpush1.msra.mxu0 0.0
        %1600 = vmatprep.subr.mxu0 0.0
        %1601 = vmatpush1.msra.mxu0 0.0
        %1602 = vmatprep.subr.mxu0 0.0
        %1603 = vmatpush1.msra.mxu0 0.0
        %1604 = vmatprep.subr.mxu0 0.0
        %1605 = vmatpush1.msra.mxu0 0.0
        %1606 = vmatprep.subr.mxu0 0.0
        %1607 = vmatpush1.msra.mxu0 0.0
        %1608 = vmatprep.subr.mxu0 0.0
        %1609 = vmatpush1.msra.mxu0 0.0
        %1610 = vmatprep.subr.mxu0 0.0
        %1611 = vmatpush1.msra.mxu0 0.0
        %1612 = vmatprep.subr.mxu0 0.0
        %1613 = vmatpush1.msra.mxu0 0.0
        %1614 = vmatprep.subr.mxu0 0.0
        %1615 = vmatpush1.msra.mxu0 0.0
        %1616 = vmatprep.subr.mxu0 0.0
        %1617 = vmatpush1.msra.mxu0 0.0
        %1618 = vmatprep.subr.mxu0 0.0
        %1619 = vmatpush1.msra.mxu0 0.0
        %1620 = vmatprep.subr.mxu0 0.0
        %1621 = vmatpush1.msra.mxu0 0.0
        %1622 = vmatprep.subr.mxu0 0.0
        %1623 = vmatpush1.msra.mxu0 0.0
        %1624 = vmatprep.subr.mxu0 0.0
        %1625 = vmatpush1.msra.mxu0 0.0
        %1626 = vmatprep.subr.mxu0 0.0
        %1627 = vmatpush1.msra.mxu0 0.0
        %1628 = vmatprep.subr.mxu0 0.0
        %1629 = vmatpush1.msra.mxu0 0.0
        %1630 = vmatprep.mubr.f32.mxu0 0.0
        %1631 = vmatmul.mubr.f32.gmra.mrb[0].mxu0 %v1558
        %v1632 = vpop.f32.mrb[0].mxu0
        %v1633 = vadd.f32 0.0, %v1632
        %v1634 = vpop.f32.mrb[0].mxu0
        %v1635 = vadd.f32 0.0, %v1634
        %1636 = vdwg.mxu0
        %v1637 = vadd.f32 %v1553, %v1633
        %v1638 = vadd.f32 %v1554, %v1635
        %1639 = vrot.lane.b32.xlu0 %v1190, 127
        %v1640 = vpop.permute.xlu0 %1639
        %1641 = vrot.lane.b32.xlu0 %v1191, 127
        %v1642 = vpop.permute.xlu0 %1641
        %v1643 = vsel %vm762, %v1640, %v1642
        %v1644 = vsel %vm762, %v1642, %v1640
        %v1645 = vmul.f32 %v1643, %v771
        %v1646 = vmul.f32 %v1644, %v775
        %s1647 = scalar_lea.vmem %s3, 20
        %v1648 = vld [vmem:[%s1647] sm:$0xf]
        %v1650 = vsel %vm302, %v1648, 0
        %v1653 = vsel %vm306, %v1645, 0
        %v1656 = vsel %vm306, %v1646, 0
        %1658 = vmatprep.subr.mxu0 %v1656
        %1659 = vmatpush1.msra.mxu0 %v1653
        %1660 = vmatprep.subr.mxu0 0.0
        %1661 = vmatpush1.msra.mxu0 0.0
        %1662 = vmatprep.subr.mxu0 0.0
        %1663 = vmatpush1.msra.mxu0 0.0
        %1664 = vmatprep.subr.mxu0 0.0
        %1665 = vmatpush1.msra.mxu0 0.0
        %1666 = vmatprep.subr.mxu0 0.0
        %1667 = vmatpush1.msra.mxu0 0.0
        %1668 = vmatprep.subr.mxu0 0.0
        %1669 = vmatpush1.msra.mxu0 0.0
        %1670 = vmatprep.subr.mxu0 0.0
        %1671 = vmatpush1.msra.mxu0 0.0
        %1672 = vmatprep.subr.mxu0 0.0
        %1673 = vmatpush1.msra.mxu0 0.0
        %1674 = vmatprep.subr.mxu0 0.0
        %1675 = vmatpush1.msra.mxu0 0.0
        %1676 = vmatprep.subr.mxu0 0.0
        %1677 = vmatpush1.msra.mxu0 0.0
        %1678 = vmatprep.subr.mxu0 0.0
        %1679 = vmatpush1.msra.mxu0 0.0
        %1680 = vmatprep.subr.mxu0 0.0
        %1681 = vmatpush1.msra.mxu0 0.0
        %1682 = vmatprep.subr.mxu0 0.0
        %1683 = vmatpush1.msra.mxu0 0.0
        %1684 = vmatprep.subr.mxu0 0.0
        %1685 = vmatpush1.msra.mxu0 0.0
        %1686 = vmatprep.subr.mxu0 0.0
        %1687 = vmatpush1.msra.mxu0 0.0
        %1688 = vmatprep.subr.mxu0 0.0
        %1689 = vmatpush1.msra.mxu0 0.0
        %1690 = vmatprep.subr.mxu0 0.0
        %1691 = vmatpush1.msra.mxu0 0.0
        %1692 = vmatprep.subr.mxu0 0.0
        %1693 = vmatpush1.msra.mxu0 0.0
        %1694 = vmatprep.subr.mxu0 0.0
        %1695 = vmatpush1.msra.mxu0 0.0
        %1696 = vmatprep.subr.mxu0 0.0
        %1697 = vmatpush1.msra.mxu0 0.0
        %1698 = vmatprep.subr.mxu0 0.0
        %1699 = vmatpush1.msra.mxu0 0.0
        %1700 = vmatprep.subr.mxu0 0.0
        %1701 = vmatpush1.msra.mxu0 0.0
        %1702 = vmatprep.subr.mxu0 0.0
        %1703 = vmatpush1.msra.mxu0 0.0
        %1704 = vmatprep.subr.mxu0 0.0
        %1705 = vmatpush1.msra.mxu0 0.0
        %1706 = vmatprep.subr.mxu0 0.0
        %1707 = vmatpush1.msra.mxu0 0.0
        %1708 = vmatprep.subr.mxu0 0.0
        %1709 = vmatpush1.msra.mxu0 0.0
        %1710 = vmatprep.subr.mxu0 0.0
        %1711 = vmatpush1.msra.mxu0 0.0
        %1712 = vmatprep.subr.mxu0 0.0
        %1713 = vmatpush1.msra.mxu0 0.0
        %1714 = vmatprep.subr.mxu0 0.0
        %1715 = vmatpush1.msra.mxu0 0.0
        %1716 = vmatprep.subr.mxu0 0.0
        %1717 = vmatpush1.msra.mxu0 0.0
        %1718 = vmatprep.subr.mxu0 0.0
        %1719 = vmatpush1.msra.mxu0 0.0
        %1720 = vmatprep.subr.mxu0 0.0
        %1721 = vmatpush1.msra.mxu0 0.0
        %1722 = vmatprep.mubr.f32.mxu0 0.0
        %1723 = vmatmul.mubr.f32.gmra.mrb[0].mxu0 %v1650
        %v1724 = vpop.f32.mrb[0].mxu0
        %v1725 = vadd.f32 0.0, %v1724
        %v1726 = vpop.f32.mrb[0].mxu0
        %v1727 = vadd.f32 0.0, %v1726
        %1728 = vdwg.mxu0
        %v1729 = vadd.f32 %v1637, %v1725
        %v1730 = vadd.f32 %v1638, %v1727
        %1731 = vrot.lane.b32.xlu0 %v1190, 113
        %v1732 = vpop.permute.xlu0 %1731
        %1733 = vrot.lane.b32.xlu0 %v1191, 113
        %v1734 = vpop.permute.xlu0 %1733
        %v1735 = vsel %vm868, %v1732, %v1734
        %v1736 = vsel %vm868, %v1734, %v1732
        %v1737 = vmul.f32 %v1735, %v877
        %v1738 = vmul.f32 %v1736, %v881
        %s1739 = scalar_lea.vmem %s3, 24
        %v1740 = vld [vmem:[%s1739] sm:$0xf]
        %v1742 = vsel %vm302, %v1740, 0
        %v1745 = vsel %vm306, %v1737, 0
        %v1748 = vsel %vm306, %v1738, 0
        %1750 = vmatprep.subr.mxu0 %v1748
        %1751 = vmatpush1.msra.mxu0 %v1745
        %1752 = vmatprep.subr.mxu0 0.0
        %1753 = vmatpush1.msra.mxu0 0.0
        %1754 = vmatprep.subr.mxu0 0.0
        %1755 = vmatpush1.msra.mxu0 0.0
        %1756 = vmatprep.subr.mxu0 0.0
        %1757 = vmatpush1.msra.mxu0 0.0
        %1758 = vmatprep.subr.mxu0 0.0
        %1759 = vmatpush1.msra.mxu0 0.0
        %1760 = vmatprep.subr.mxu0 0.0
        %1761 = vmatpush1.msra.mxu0 0.0
        %1762 = vmatprep.subr.mxu0 0.0
        %1763 = vmatpush1.msra.mxu0 0.0
        %1764 = vmatprep.subr.mxu0 0.0
        %1765 = vmatpush1.msra.mxu0 0.0
        %1766 = vmatprep.subr.mxu0 0.0
        %1767 = vmatpush1.msra.mxu0 0.0
        %1768 = vmatprep.subr.mxu0 0.0
        %1769 = vmatpush1.msra.mxu0 0.0
        %1770 = vmatprep.subr.mxu0 0.0
        %1771 = vmatpush1.msra.mxu0 0.0
        %1772 = vmatprep.subr.mxu0 0.0
        %1773 = vmatpush1.msra.mxu0 0.0
        %1774 = vmatprep.subr.mxu0 0.0
        %1775 = vmatpush1.msra.mxu0 0.0
        %1776 = vmatprep.subr.mxu0 0.0
        %1777 = vmatpush1.msra.mxu0 0.0
        %1778 = vmatprep.subr.mxu0 0.0
        %1779 = vmatpush1.msra.mxu0 0.0
        %1780 = vmatprep.subr.mxu0 0.0
        %1781 = vmatpush1.msra.mxu0 0.0
        %1782 = vmatprep.subr.mxu0 0.0
        %1783 = vmatpush1.msra.mxu0 0.0
        %1784 = vmatprep.subr.mxu0 0.0
        %1785 = vmatpush1.msra.mxu0 0.0
        %1786 = vmatprep.subr.mxu0 0.0
        %1787 = vmatpush1.msra.mxu0 0.0
        %1788 = vmatprep.subr.mxu0 0.0
        %1789 = vmatpush1.msra.mxu0 0.0
        %1790 = vmatprep.subr.mxu0 0.0
        %1791 = vmatpush1.msra.mxu0 0.0
        %1792 = vmatprep.subr.mxu0 0.0
        %1793 = vmatpush1.msra.mxu0 0.0
        %1794 = vmatprep.subr.mxu0 0.0
        %1795 = vmatpush1.msra.mxu0 0.0
        %1796 = vmatprep.subr.mxu0 0.0
        %1797 = vmatpush1.msra.mxu0 0.0
        %1798 = vmatprep.subr.mxu0 0.0
        %1799 = vmatpush1.msra.mxu0 0.0
        %1800 = vmatprep.subr.mxu0 0.0
        %1801 = vmatpush1.msra.mxu0 0.0
        %1802 = vmatprep.subr.mxu0 0.0
        %1803 = vmatpush1.msra.mxu0 0.0
        %1804 = vmatprep.subr.mxu0 0.0
        %1805 = vmatpush1.msra.mxu0 0.0
        %1806 = vmatprep.subr.mxu0 0.0
        %1807 = vmatpush1.msra.mxu0 0.0
        %1808 = vmatprep.subr.mxu0 0.0
        %1809 = vmatpush1.msra.mxu0 0.0
        %1810 = vmatprep.subr.mxu0 0.0
        %1811 = vmatpush1.msra.mxu0 0.0
        %1812 = vmatprep.subr.mxu0 0.0
        %1813 = vmatpush1.msra.mxu0 0.0
        %1814 = vmatprep.mubr.f32.mxu0 0.0
        %1815 = vmatmul.mubr.f32.gmra.mrb[0].mxu0 %v1742
        %v1816 = vpop.f32.mrb[0].mxu0
        %v1817 = vadd.f32 0.0, %v1816
        %v1818 = vpop.f32.mrb[0].mxu0
        %v1819 = vadd.f32 0.0, %v1818
        %1820 = vdwg.mxu0
        %v1821 = vadd.f32 %v1729, %v1817
        %v1822 = vadd.f32 %v1730, %v1819
        %1823 = vrot.lane.b32.xlu0 %v1190, 112
        %v1824 = vpop.permute.xlu0 %1823
        %1825 = vrot.lane.b32.xlu0 %v1191, 112
        %v1826 = vpop.permute.xlu0 %1825
        %v1827 = vsel %vm974, %v1824, %v1826
        %v1828 = vsel %vm974, %v1826, %v1824
        %v1829 = vmul.f32 %v1827, %v983
        %v1830 = vmul.f32 %v1828, %v987
        %s1831 = scalar_lea.vmem %s3, 28
        %v1832 = vld [vmem:[%s1831] sm:$0xf]
        %v1834 = vsel %vm302, %v1832, 0
        %v1837 = vsel %vm306, %v1829, 0
        %v1840 = vsel %vm306, %v1830, 0
        %1842 = vmatprep.subr.mxu0 %v1840
        %1843 = vmatpush1.msra.mxu0 %v1837
        %1844 = vmatprep.subr.mxu0 0.0
        %1845 = vmatpush1.msra.mxu0 0.0
        %1846 = vmatprep.subr.mxu0 0.0
        %1847 = vmatpush1.msra.mxu0 0.0
        %1848 = vmatprep.subr.mxu0 0.0
        %1849 = vmatpush1.msra.mxu0 0.0
        %1850 = vmatprep.subr.mxu0 0.0
        %1851 = vmatpush1.msra.mxu0 0.0
        %1852 = vmatprep.subr.mxu0 0.0
        %1853 = vmatpush1.msra.mxu0 0.0
        %1854 = vmatprep.subr.mxu0 0.0
        %1855 = vmatpush1.msra.mxu0 0.0
        %1856 = vmatprep.subr.mxu0 0.0
        %1857 = vmatpush1.msra.mxu0 0.0
        %1858 = vmatprep.subr.mxu0 0.0
        %1859 = vmatpush1.msra.mxu0 0.0
        %1860 = vmatprep.subr.mxu0 0.0
        %1861 = vmatpush1.msra.mxu0 0.0
        %1862 = vmatprep.subr.mxu0 0.0
        %1863 = vmatpush1.msra.mxu0 0.0
        %1864 = vmatprep.subr.mxu0 0.0
        %1865 = vmatpush1.msra.mxu0 0.0
        %1866 = vmatprep.subr.mxu0 0.0
        %1867 = vmatpush1.msra.mxu0 0.0
        %1868 = vmatprep.subr.mxu0 0.0
        %1869 = vmatpush1.msra.mxu0 0.0
        %1870 = vmatprep.subr.mxu0 0.0
        %1871 = vmatpush1.msra.mxu0 0.0
        %1872 = vmatprep.subr.mxu0 0.0
        %1873 = vmatpush1.msra.mxu0 0.0
        %1874 = vmatprep.subr.mxu0 0.0
        %1875 = vmatpush1.msra.mxu0 0.0
        %1876 = vmatprep.subr.mxu0 0.0
        %1877 = vmatpush1.msra.mxu0 0.0
        %1878 = vmatprep.subr.mxu0 0.0
        %1879 = vmatpush1.msra.mxu0 0.0
        %1880 = vmatprep.subr.mxu0 0.0
        %1881 = vmatpush1.msra.mxu0 0.0
        %1882 = vmatprep.subr.mxu0 0.0
        %1883 = vmatpush1.msra.mxu0 0.0
        %1884 = vmatprep.subr.mxu0 0.0
        %1885 = vmatpush1.msra.mxu0 0.0
        %1886 = vmatprep.subr.mxu0 0.0
        %1887 = vmatpush1.msra.mxu0 0.0
        %1888 = vmatprep.subr.mxu0 0.0
        %1889 = vmatpush1.msra.mxu0 0.0
        %1890 = vmatprep.subr.mxu0 0.0
        %1891 = vmatpush1.msra.mxu0 0.0
        %1892 = vmatprep.subr.mxu0 0.0
        %1893 = vmatpush1.msra.mxu0 0.0
        %1894 = vmatprep.subr.mxu0 0.0
        %1895 = vmatpush1.msra.mxu0 0.0
        %1896 = vmatprep.subr.mxu0 0.0
        %1897 = vmatpush1.msra.mxu0 0.0
        %1898 = vmatprep.subr.mxu0 0.0
        %1899 = vmatpush1.msra.mxu0 0.0
        %1900 = vmatprep.subr.mxu0 0.0
        %1901 = vmatpush1.msra.mxu0 0.0
        %1902 = vmatprep.subr.mxu0 0.0
        %1903 = vmatpush1.msra.mxu0 0.0
        %1904 = vmatprep.subr.mxu0 0.0
        %1905 = vmatpush1.msra.mxu0 0.0
        %1906 = vmatprep.mubr.f32.mxu0 0.0
        %1907 = vmatmul.mubr.f32.gmra.mrb[0].mxu0 %v1834
        %v1908 = vpop.f32.mrb[0].mxu0
        %v1909 = vadd.f32 0.0, %v1908
        %v1910 = vpop.f32.mrb[0].mxu0
        %v1911 = vadd.f32 0.0, %v1910
        %1912 = vdwg.mxu0
        %v1913 = vadd.f32 %v1821, %v1909
        %v1914 = vadd.f32 %v1822, %v1911
        %1915 = vrot.lane.b32.xlu0 %v1190, 111
        %v1916 = vpop.permute.xlu0 %1915
        %1917 = vrot.lane.b32.xlu0 %v1191, 111
        %v1918 = vpop.permute.xlu0 %1917
        %v1919 = vsel %vm1080, %v1916, %v1918
        %v1920 = vsel %vm1080, %v1918, %v1916
        %v1921 = vmul.f32 %v1919, %v1089
        %v1922 = vmul.f32 %v1920, %v1093
        %s1923 = scalar_lea.vmem %s3, 32
        %v1924 = vld [vmem:[%s1923] sm:$0xf]
        %v1926 = vsel %vm302, %v1924, 0
        %v1929 = vsel %vm306, %v1921, 0
        %v1932 = vsel %vm306, %v1922, 0
        %1934 = vmatprep.subr.mxu0 %v1932
        %1935 = vmatpush1.msra.mxu0 %v1929
        %1936 = vmatprep.subr.mxu0 0.0
        %1937 = vmatpush1.msra.mxu0 0.0
        %1938 = vmatprep.subr.mxu0 0.0
        %1939 = vmatpush1.msra.mxu0 0.0
        %1940 = vmatprep.subr.mxu0 0.0
        %1941 = vmatpush1.msra.mxu0 0.0
        %1942 = vmatprep.subr.mxu0 0.0
        %1943 = vmatpush1.msra.mxu0 0.0
        %1944 = vmatprep.subr.mxu0 0.0
        %1945 = vmatpush1.msra.mxu0 0.0
        %1946 = vmatprep.subr.mxu0 0.0
        %1947 = vmatpush1.msra.mxu0 0.0
        %1948 = vmatprep.subr.mxu0 0.0
        %1949 = vmatpush1.msra.mxu0 0.0
        %1950 = vmatprep.subr.mxu0 0.0
        %1951 = vmatpush1.msra.mxu0 0.0
        %1952 = vmatprep.subr.mxu0 0.0
        %1953 = vmatpush1.msra.mxu0 0.0
        %1954 = vmatprep.subr.mxu0 0.0
        %1955 = vmatpush1.msra.mxu0 0.0
        %1956 = vmatprep.subr.mxu0 0.0
        %1957 = vmatpush1.msra.mxu0 0.0
        %1958 = vmatprep.subr.mxu0 0.0
        %1959 = vmatpush1.msra.mxu0 0.0
        %1960 = vmatprep.subr.mxu0 0.0
        %1961 = vmatpush1.msra.mxu0 0.0
        %1962 = vmatprep.subr.mxu0 0.0
        %1963 = vmatpush1.msra.mxu0 0.0
        %1964 = vmatprep.subr.mxu0 0.0
        %1965 = vmatpush1.msra.mxu0 0.0
        %1966 = vmatprep.subr.mxu0 0.0
        %1967 = vmatpush1.msra.mxu0 0.0
        %1968 = vmatprep.subr.mxu0 0.0
        %1969 = vmatpush1.msra.mxu0 0.0
        %1970 = vmatprep.subr.mxu0 0.0
        %1971 = vmatpush1.msra.mxu0 0.0
        %1972 = vmatprep.subr.mxu0 0.0
        %1973 = vmatpush1.msra.mxu0 0.0
        %1974 = vmatprep.subr.mxu0 0.0
        %1975 = vmatpush1.msra.mxu0 0.0
        %1976 = vmatprep.subr.mxu0 0.0
        %1977 = vmatpush1.msra.mxu0 0.0
        %1978 = vmatprep.subr.mxu0 0.0
        %1979 = vmatpush1.msra.mxu0 0.0
        %1980 = vmatprep.subr.mxu0 0.0
        %1981 = vmatpush1.msra.mxu0 0.0
        %1982 = vmatprep.subr.mxu0 0.0
        %1983 = vmatpush1.msra.mxu0 0.0
        %1984 = vmatprep.subr.mxu0 0.0
        %1985 = vmatpush1.msra.mxu0 0.0
        %1986 = vmatprep.subr.mxu0 0.0
        %1987 = vmatpush1.msra.mxu0 0.0
        %1988 = vmatprep.subr.mxu0 0.0
        %1989 = vmatpush1.msra.mxu0 0.0
        %1990 = vmatprep.subr.mxu0 0.0
        %1991 = vmatpush1.msra.mxu0 0.0
        %1992 = vmatprep.subr.mxu0 0.0
        %1993 = vmatpush1.msra.mxu0 0.0
        %1994 = vmatprep.subr.mxu0 0.0
        %1995 = vmatpush1.msra.mxu0 0.0
        %1996 = vmatprep.subr.mxu0 0.0
        %1997 = vmatpush1.msra.mxu0 0.0
        %1998 = vmatprep.mubr.f32.mxu0 0.0
        %1999 = vmatmul.mubr.f32.gmra.mrb[0].mxu0 %v1926
        %v2000 = vpop.f32.mrb[0].mxu0
        %v2001 = vadd.f32 0.0, %v2000
        %v2002 = vpop.f32.mrb[0].mxu0
        %v2003 = vadd.f32 0.0, %v2002
        %2004 = vdwg.mxu0
        %v2005 = vadd.f32 %v1913, %v2001
        %v2006 = vadd.f32 %v1914, %v2003
        %v2007 = vld [vmem:[%s4] sm:$0xf]
        %2009 = vset.pattern.permute.xlu0 0
        %2010 = vperm.xlu0 %2009, %v2007
        %v2011 = vpop.permute.xlu0 %2010
        %v2013 = vadd.f32 %v2005, %v2011
        %v2014 = vadd.f32 %v2006, %v2011
        %v2015 = vadd.f32 %v2013, %v250
        %v2016 = vadd.f32 %v2014, %v252
        %v2017 = vmax.f32 %v2015, 0.0
        %v2018 = vmax.f32 %v2016, 0.0
        %v2021 = vcombine.low %v2017, %v2018
        %2023 = vst [vmem:[%s244] sm:$0xff] %v2021
        %s2024 = sand.u32 %s159, 1
        %s2025 = scalar_lea.sflag [#allocation3], %s2024
        %s2026 = sand.u32 %s159, 1
        %s2027 = smul.addr %s2026, 8
        %s2028 = scalar_lea.vmem [#allocation2], %s2027
        // Predicated region
        $region45: #{tpu_custom_call.1} parent=43 // pred_check
          %p2029 = pneg %p169
        $region46: #{tpu_custom_call.1} parent=43 // pred_check_branch
          %2031 = sbr.rel (%p2029) target = $region48
        $region47: #{tpu_custom_call.1} parent=43 // pred_region
          %s2033 = ssub.s32 128, 128
          %2034 = vsyncadd %s2025, %s2033
          %s2035 = smul.addr %s20, 2
          %s2036 = smul.addr %s2035, 64
          %s2037 = scalar_lea.hbm %s6, %s2036
          %s2039 = sshll.u32 %s2028, 4
          %s2040 = int_to_ptr.vmem [resolvable:$true] %s2039
          %2042 = dma.vmem_to_hbm [thread:$0]  %s2040, 128, %s2037, %s2025
        $region48: #{tpu_custom_call.1} parent=43 // pred_fallthru
          _
      $region44: #{tpu_custom_call.1} parent=5 // pred_fallthru
        _
      %p2043 = scmp.le.s32.totalorder 2, %s15
      // Predicated region
      $region49: #{tpu_custom_call.1} parent=5 // pred_check
        %p2044 = pneg %p2043
      $region50: #{tpu_custom_call.1} parent=5 // pred_check_branch
        %2046 = sbr.rel (%p2044) target = $region52
      $region51: #{tpu_custom_call.1} parent=5 // pred_region
        %s2047 = ssub.s32 %s15, 2
        // Predicated region
        $region53: #{tpu_custom_call.1} parent=51 // pred_check
          %p2048 = pneg %p175
        $region54: #{tpu_custom_call.1} parent=51 // pred_check_branch
          %2050 = sbr.rel (%p2048) target = $region56
        $region55: #{tpu_custom_call.1} parent=51 // pred_region
          %s2051 = sand.u32 %s160, 1
          %s2052 = scalar_lea.sflag [#allocation3], %s2051
          %s2053 = sand.u32 %s160, 1
          %s2054 = smul.addr %s2053, 8
          %s2055 = scalar_lea.vmem [#allocation2], %s2054
          %2056 = dma.done %s2052, 128
        $region56: #{tpu_custom_call.1} parent=51 // pred_fallthru
          _
      $region52: #{tpu_custom_call.1} parent=5 // pred_fallthru
        _
    $region6: #{tpu_custom_call.1} parent=1 // loop_footer
      %s19 = sadd.s32 1, %s15
    $region7: #{tpu_custom_call.1} parent=1 // loop_footer_branch
      %14 = sbr.rel target = $region3
    $region8: #{tpu_custom_call.1} parent=1 // loop_exit
      _
    %2057 = vsyncpa [#allocation3], 1
    %s2058 = scalar_lea.sflag [#allocation3], 1
    %2059 = vsyncpa %s2058, 1

</llo_original>
